<compile_context>
chip_gen: v7x
topology: tpu7x:2x2x1
jax: 0.10.0
libtpu: 0.0.40
codegen_flags: <defaults>
</compile_context>

<pallas_src>
import functools

import jax
import jax.numpy as jnp
from jax.experimental import pallas as pl
from jax.experimental.pallas import tpu as pltpu


# ----------------------------- fused Pallas kernel ---------------------------

def _fused_cross_attn_kernel(x_ref, y_ref,
                             wq_ref, bq_ref,
                             wk_ref, bk_ref,
                             wv_ref, bv_ref,
                             wp_ref, bp_ref,
                             o_ref, *, num_heads):
    # x_ref: (1, N1, C)  gauss_embeds block
    # y_ref: (1, N2, C)  scale_features block
    # w*_ref: (C, C) pre-transposed weights (Cin, Cout); b*_ref: (1, C)
    # o_ref: (1, N1, C)
    f32 = jnp.float32

    x = x_ref[0].astype(f32)                                  # (N1, C)
    y = y_ref[0].astype(f32)                                  # (N2, C)

    # Projections (weights already (Cin, Cout) -> no in-kernel transpose).
    q = jnp.dot(x, wq_ref[...].astype(f32),
                preferred_element_type=f32) + bq_ref[...].astype(f32)   # (N1, C)
    k = jnp.dot(y, wk_ref[...].astype(f32),
                preferred_element_type=f32) + bk_ref[...].astype(f32)   # (N2, C)
    v = jnp.dot(y, wv_ref[...].astype(f32),
                preferred_element_type=f32) + bv_ref[...].astype(f32)   # (N2, C)

    C = q.shape[-1]
    hd = C // num_heads
    wp = wp_ref[...].astype(f32)                              # (C, C) = (Cin, Cout)

    # Per-head attention, fully unrolled (num_heads is small and static).
    # The output projection is fused into the head loop: out = sum_h oh @ Wp[h].
    acc = jnp.zeros((x.shape[0], C), f32)                     # (N1, C)
    for h in range(num_heads):
        sl = slice(h * hd, (h + 1) * hd)
        qh = q[:, sl]                                         # (N1, hd)
        kh = k[:, sl]                                         # (N2, hd)
        vh = v[:, sl]                                         # (N2, hd)

        # scores = qh @ kh^T (no scale -- matches the PyTorch code, see note).
        s = jax.lax.dot_general(qh, kh, (((1,), (1,)), ((), ())),
                                preferred_element_type=f32)   # (N1, N2)
        s = s - jnp.max(s, axis=-1, keepdims=True)
        p = jnp.exp(s)
        p = p * pl.reciprocal(jnp.sum(p, axis=-1, keepdims=True), approx=True)

        oh = jnp.dot(p, vh, preferred_element_type=f32)       # (N1, hd)
        acc = acc + jnp.dot(oh, wp[sl, :],
                            preferred_element_type=f32)       # (N1, C)

    out = acc + bp_ref[...].astype(f32)
    o_ref[0] = out.astype(o_ref.dtype)


# --------------------------------- wrapper -----------------------------------

@functools.partial(jax.jit, static_argnames=("num_heads",))
def cross_attention(gauss_embeds, scale_features, params, *, num_heads):
    B, N1, C = gauss_embeds.shape
    _, N2, _ = scale_features.shape

    # Pre-transpose weights to (Cin, Cout) and split the kv projection so the
    # kernel never has to transpose weights or slice a 2C-wide activation.
    wq_t = params["wq"].T                    # (C, C)
    wk_t = params["wkv"][:C, :].T            # (C, C)
    wv_t = params["wkv"][C:, :].T            # (C, C)
    wp_t = params["wproj"].T                 # (C, C)
    bq = params["bq"].reshape(1, C)
    bk = params["bkv"][:C].reshape(1, C)
    bv = params["bkv"][C:].reshape(1, C)
    bp = params["bproj"].reshape(1, C)

    kernel = functools.partial(_fused_cross_attn_kernel, num_heads=num_heads)

    const = lambda b: (0, 0)                 # weights/biases: resident across grid
    return pl.pallas_call(
        kernel,
        out_shape=jax.ShapeDtypeStruct((B, N1, C), gauss_embeds.dtype),
        grid=(B,),
        in_specs=[
            pl.BlockSpec((1, N1, C), lambda b: (b, 0, 0)),   # gauss_embeds
            pl.BlockSpec((1, N2, C), lambda b: (b, 0, 0)),   # scale_features
            pl.BlockSpec((C, C), const), pl.BlockSpec((1, C), const),   # q
            pl.BlockSpec((C, C), const), pl.BlockSpec((1, C), const),   # k
            pl.BlockSpec((C, C), const), pl.BlockSpec((1, C), const),   # v
            pl.BlockSpec((C, C), const), pl.BlockSpec((1, C), const),   # proj
        ],
        out_specs=pl.BlockSpec((1, N1, C), lambda b: (b, 0, 0)),
        compiler_params=pltpu.CompilerParams(
            dimension_semantics=("parallel",)),   # v7x: one batch elem per TC
    )(gauss_embeds, scale_features, wq_t, bq, wk_t, bk, wv_t, bv, wp_t, bp)
    # TODO(synk): if N1/N2/C ever grow to thousands, add N-tiling (and bf16 MXU
    # operands) sized against v7x's 64 MiB VMEM; unnecessary at these sizes.


# --------------------------- reference (pure JAX) ----------------------------

def cross_attention_ref(gauss_embeds, scale_features, params, num_heads):
    B1, N1, C = gauss_embeds.shape
    B2, N2, _ = scale_features.shape
    hd = C // num_heads
    q = gauss_embeds @ params["wq"].T + params["bq"]
    kv = scale_features @ params["wkv"].T + params["bkv"]
    k, v = kv[..., :C], kv[..., C:]
    qh = q.reshape(B1, N1, num_heads, hd).transpose(0, 2, 1, 3)
    kh = k.reshape(B2, N2, num_heads, hd).transpose(0, 2, 1, 3)
    vh = v.reshape(B2, N2, num_heads, hd).transpose(0, 2, 1, 3)
    s = jnp.einsum("bhqd,bhkd->bhqk", qh, kh)          # no scale (matches torch code)
    p = jax.nn.softmax(s, axis=-1)
    oh = jnp.einsum("bhqk,bhkd->bhqd", p, vh)
    o = oh.transpose(0, 2, 1, 3).reshape(B1, N1, C)
    return o @ params["wproj"].T + params["bproj"]


# --------------------------------- main --------------------------------------

if __name__ == "__main__":
    dim = 32
    num_heads = 4
    B, N1, N2 = 2, 8, 16

    key = jax.random.PRNGKey(0)
    ks = jax.random.split(key, 8)
    init = lambda k, shape: (0.02 * jax.random.normal(k, shape)).astype(jnp.float32)

    params = {
        "wq":    init(ks[0], (dim, dim)),
        "bq":    init(ks[1], (dim,)),
        "wkv":   init(ks[2], (2 * dim, dim)),
        "bkv":   init(ks[3], (2 * dim,)),
        "wproj": init(ks[4], (dim, dim)),
        "bproj": init(ks[5], (dim,)),
    }

    gauss_embeds = jax.random.normal(ks[6], (B, N1, dim), dtype=jnp.float32)
    scale_features = jax.random.normal(ks[7], (B, N2, dim), dtype=jnp.float32)

    out = cross_attention(gauss_embeds, scale_features, params, num_heads=num_heads)
    out = jax.block_until_ready(out)

    ref = cross_attention_ref(gauss_embeds, scale_features, params, num_heads)
    assert out.shape == (B, N1, dim)
    # Tolerance slightly relaxed vs 1e-5 because the softmax denominator uses the
    # EUP approximate reciprocal (pl.reciprocal(approx=True)).
    assert jnp.allclose(out, ref, atol=1e-3, rtol=1e-3), float(
        jnp.max(jnp.abs(out - ref)))

    print("KERNEL_OK")
</pallas_src>

<mosaic_0001>
module attributes {stable_mosaic.version = 11 : i64} {
  func.func @_fused_cross_attn_kernel(%arg0: i32, %arg1: memref<1x8x32xf32, #tpu.memory_space<vmem>>, %arg2: memref<1x16x32xf32, #tpu.memory_space<vmem>>, %arg3: memref<32x32xf32, #tpu.memory_space<vmem>>, %arg4: memref<1x32xf32, #tpu.memory_space<vmem>>, %arg5: memref<32x32xf32, #tpu.memory_space<vmem>>, %arg6: memref<1x32xf32, #tpu.memory_space<vmem>>, %arg7: memref<32x32xf32, #tpu.memory_space<vmem>>, %arg8: memref<1x32xf32, #tpu.memory_space<vmem>>, %arg9: memref<32x32xf32, #tpu.memory_space<vmem>>, %arg10: memref<1x32xf32, #tpu.memory_space<vmem>>, %arg11: memref<1x8x32xf32, #tpu.memory_space<vmem>>) attributes {dimension_semantics = [#tpu.dimension_semantics<parallel>], iteration_bounds = array<i64: 2>, scalar_prefetch = 0 : i64, scratch_operands = 0 : i64, tpu.core_type = #tpu.core_type<tc>, window_params = [{transform_indices = @transform_0, window_bounds = array<i64: 1, 8, 32>}, {transform_indices = @transform_1, window_bounds = array<i64: 1, 16, 32>}, {pipeline_mode = #tpu.pipeline_mode<synchronous>, transform_indices = @transform_2, window_bounds = array<i64: 32, 32>}, {pipeline_mode = #tpu.pipeline_mode<synchronous>, transform_indices = @transform_3, window_bounds = array<i64: 1, 32>}, {pipeline_mode = #tpu.pipeline_mode<synchronous>, transform_indices = @transform_4, window_bounds = array<i64: 32, 32>}, {pipeline_mode = #tpu.pipeline_mode<synchronous>, transform_indices = @transform_5, window_bounds = array<i64: 1, 32>}, {pipeline_mode = #tpu.pipeline_mode<synchronous>, transform_indices = @transform_6, window_bounds = array<i64: 32, 32>}, {pipeline_mode = #tpu.pipeline_mode<synchronous>, transform_indices = @transform_7, window_bounds = array<i64: 1, 32>}, {pipeline_mode = #tpu.pipeline_mode<synchronous>, transform_indices = @transform_8, window_bounds = array<i64: 32, 32>}, {pipeline_mode = #tpu.pipeline_mode<synchronous>, transform_indices = @transform_9, window_bounds = array<i64: 1, 32>}, {transform_indices = @transform_10, window_bounds = array<i64: 1, 8, 32>}]} {
    %c0 = arith.constant 0 : index
    %c0_0 = arith.constant 0 : index
    %c0_1 = arith.constant 0 : index
    %0 = vector.load %arg1[%c0, %c0_0, %c0_1] : memref<1x8x32xf32, #tpu.memory_space<vmem>>, vector<1x8x32xf32>
    %1 = vector.shape_cast %0 : vector<1x8x32xf32> to vector<8x32xf32>
    %c0_2 = arith.constant 0 : index
    %c0_3 = arith.constant 0 : index
    %c0_4 = arith.constant 0 : index
    %2 = vector.load %arg2[%c0_2, %c0_3, %c0_4] : memref<1x16x32xf32, #tpu.memory_space<vmem>>, vector<1x16x32xf32>
    %3 = vector.shape_cast %2 : vector<1x16x32xf32> to vector<16x32xf32>
    %c0_5 = arith.constant 0 : index
    %c0_6 = arith.constant 0 : index
    %4 = vector.load %arg3[%c0_5, %c0_6] : memref<32x32xf32, #tpu.memory_space<vmem>>, vector<32x32xf32>
    %cst = arith.constant dense<0.000000e+00> : vector<8x32xf32>
    %5 = tpu.matmul %1, %4, %cst {dimension_numbers = #tpu.dot_dimension_numbers<[1], [0], [0], [1], [0, 0, 1, 1], [], []>} : vector<8x32xf32>, vector<32x32xf32>, vector<8x32xf32> -> vector<8x32xf32>
    %c0_7 = arith.constant 0 : index
    %c0_8 = arith.constant 0 : index
    %6 = vector.load %arg4[%c0_7, %c0_8] : memref<1x32xf32, #tpu.memory_space<vmem>>, vector<1x32xf32>
    %7 = vector.broadcast %6 : vector<1x32xf32> to vector<8x32xf32>
    %8 = arith.addf %5, %7 : vector<8x32xf32>
    %c0_9 = arith.constant 0 : index
    %c0_10 = arith.constant 0 : index
    %9 = vector.load %arg5[%c0_9, %c0_10] : memref<32x32xf32, #tpu.memory_space<vmem>>, vector<32x32xf32>
    %cst_11 = arith.constant dense<0.000000e+00> : vector<16x32xf32>
    %10 = tpu.matmul %3, %9, %cst_11 {dimension_numbers = #tpu.dot_dimension_numbers<[1], [0], [0], [1], [0, 0, 1, 1], [], []>} : vector<16x32xf32>, vector<32x32xf32>, vector<16x32xf32> -> vector<16x32xf32>
    %c0_12 = arith.constant 0 : index
    %c0_13 = arith.constant 0 : index
    %11 = vector.load %arg6[%c0_12, %c0_13] : memref<1x32xf32, #tpu.memory_space<vmem>>, vector<1x32xf32>
    %12 = vector.broadcast %11 : vector<1x32xf32> to vector<16x32xf32>
    %13 = arith.addf %10, %12 : vector<16x32xf32>
    %c0_14 = arith.constant 0 : index
    %c0_15 = arith.constant 0 : index
    %14 = vector.load %arg7[%c0_14, %c0_15] : memref<32x32xf32, #tpu.memory_space<vmem>>, vector<32x32xf32>
    %cst_16 = arith.constant dense<0.000000e+00> : vector<16x32xf32>
    %15 = tpu.matmul %3, %14, %cst_16 {dimension_numbers = #tpu.dot_dimension_numbers<[1], [0], [0], [1], [0, 0, 1, 1], [], []>} : vector<16x32xf32>, vector<32x32xf32>, vector<16x32xf32> -> vector<16x32xf32>
    %c0_17 = arith.constant 0 : index
    %c0_18 = arith.constant 0 : index
    %16 = vector.load %arg8[%c0_17, %c0_18] : memref<1x32xf32, #tpu.memory_space<vmem>>, vector<1x32xf32>
    %17 = vector.broadcast %16 : vector<1x32xf32> to vector<16x32xf32>
    %18 = arith.addf %15, %17 : vector<16x32xf32>
    %c0_19 = arith.constant 0 : index
    %c0_20 = arith.constant 0 : index
    %19 = vector.load %arg9[%c0_19, %c0_20] : memref<32x32xf32, #tpu.memory_space<vmem>>, vector<32x32xf32>
    %cst_21 = arith.constant 0.000000e+00 : f32
    %20 = vector.broadcast %cst_21 : f32 to vector<8x32xf32>
    %21 = vector.extract_strided_slice %8 {offsets = [0, 0], sizes = [8, 8], strides = [1, 1]} : vector<8x32xf32> to vector<8x8xf32>
    %22 = vector.extract_strided_slice %13 {offsets = [0, 0], sizes = [16, 8], strides = [1, 1]} : vector<16x32xf32> to vector<16x8xf32>
    %23 = vector.extract_strided_slice %18 {offsets = [0, 0], sizes = [16, 8], strides = [1, 1]} : vector<16x32xf32> to vector<16x8xf32>
    %cst_22 = arith.constant dense<0.000000e+00> : vector<8x16xf32>
    %24 = tpu.matmul %21, %22, %cst_22 {dimension_numbers = #tpu.dot_dimension_numbers<[1], [1], [0], [0], [0, 0, 1, 0], [], []>} : vector<8x8xf32>, vector<16x8xf32>, vector<8x16xf32> -> vector<8x16xf32>
    %cst_23 = arith.constant dense<0xFF800000> : vector<8xf32>
    %25 = vector.multi_reduction <maximumf>, %24, %cst_23 [1] : vector<8x16xf32> to vector<8xf32>
    %26 = vector.shape_cast %25 : vector<8xf32> to vector<8x1xf32>
    %27 = vector.broadcast %26 : vector<8x1xf32> to vector<8x16xf32>
    %28 = arith.subf %24, %27 : vector<8x16xf32>
    %29 = math.exp %28 : vector<8x16xf32>
    %cst_24 = arith.constant dense<0.000000e+00> : vector<8xf32>
    %30 = vector.multi_reduction <add>, %29, %cst_24 [1] : vector<8x16xf32> to vector<8xf32>
    %31 = vector.shape_cast %30 : vector<8xf32> to vector<8x1xf32>
    %32 = tpu.reciprocal %31 {approx = true} : vector<8x1xf32> -> vector<8x1xf32>
    %33 = vector.broadcast %32 : vector<8x1xf32> to vector<8x16xf32>
    %34 = arith.mulf %29, %33 : vector<8x16xf32>
    %cst_25 = arith.constant dense<0.000000e+00> : vector<8x8xf32>
    %35 = tpu.matmul %34, %23, %cst_25 {dimension_numbers = #tpu.dot_dimension_numbers<[1], [0], [0], [1], [0, 0, 1, 1], [], []>} : vector<8x16xf32>, vector<16x8xf32>, vector<8x8xf32> -> vector<8x8xf32>
    %36 = vector.extract_strided_slice %19 {offsets = [0, 0], sizes = [8, 32], strides = [1, 1]} : vector<32x32xf32> to vector<8x32xf32>
    %cst_26 = arith.constant dense<0.000000e+00> : vector<8x32xf32>
    %37 = tpu.matmul %35, %36, %cst_26 {dimension_numbers = #tpu.dot_dimension_numbers<[1], [0], [0], [1], [0, 0, 1, 1], [], []>} : vector<8x8xf32>, vector<8x32xf32>, vector<8x32xf32> -> vector<8x32xf32>
    %38 = arith.addf %20, %37 : vector<8x32xf32>
    %39 = vector.extract_strided_slice %8 {offsets = [0, 8], sizes = [8, 8], strides = [1, 1]} : vector<8x32xf32> to vector<8x8xf32>
    %40 = vector.extract_strided_slice %13 {offsets = [0, 8], sizes = [16, 8], strides = [1, 1]} : vector<16x32xf32> to vector<16x8xf32>
    %41 = vector.extract_strided_slice %18 {offsets = [0, 8], sizes = [16, 8], strides = [1, 1]} : vector<16x32xf32> to vector<16x8xf32>
    %cst_27 = arith.constant dense<0.000000e+00> : vector<8x16xf32>
    %42 = tpu.matmul %39, %40, %cst_27 {dimension_numbers = #tpu.dot_dimension_numbers<[1], [1], [0], [0], [0, 0, 1, 0], [], []>} : vector<8x8xf32>, vector<16x8xf32>, vector<8x16xf32> -> vector<8x16xf32>
    %cst_28 = arith.constant dense<0xFF800000> : vector<8xf32>
    %43 = vector.multi_reduction <maximumf>, %42, %cst_28 [1] : vector<8x16xf32> to vector<8xf32>
    %44 = vector.shape_cast %43 : vector<8xf32> to vector<8x1xf32>
    %45 = vector.broadcast %44 : vector<8x1xf32> to vector<8x16xf32>
    %46 = arith.subf %42, %45 : vector<8x16xf32>
    %47 = math.exp %46 : vector<8x16xf32>
    %cst_29 = arith.constant dense<0.000000e+00> : vector<8xf32>
    %48 = vector.multi_reduction <add>, %47, %cst_29 [1] : vector<8x16xf32> to vector<8xf32>
    %49 = vector.shape_cast %48 : vector<8xf32> to vector<8x1xf32>
    %50 = tpu.reciprocal %49 {approx = true} : vector<8x1xf32> -> vector<8x1xf32>
    %51 = vector.broadcast %50 : vector<8x1xf32> to vector<8x16xf32>
    %52 = arith.mulf %47, %51 : vector<8x16xf32>
    %cst_30 = arith.constant dense<0.000000e+00> : vector<8x8xf32>
    %53 = tpu.matmul %52, %41, %cst_30 {dimension_numbers = #tpu.dot_dimension_numbers<[1], [0], [0], [1], [0, 0, 1, 1], [], []>} : vector<8x16xf32>, vector<16x8xf32>, vector<8x8xf32> -> vector<8x8xf32>
    %54 = vector.extract_strided_slice %19 {offsets = [8, 0], sizes = [8, 32], strides = [1, 1]} : vector<32x32xf32> to vector<8x32xf32>
    %cst_31 = arith.constant dense<0.000000e+00> : vector<8x32xf32>
    %55 = tpu.matmul %53, %54, %cst_31 {dimension_numbers = #tpu.dot_dimension_numbers<[1], [0], [0], [1], [0, 0, 1, 1], [], []>} : vector<8x8xf32>, vector<8x32xf32>, vector<8x32xf32> -> vector<8x32xf32>
    %56 = arith.addf %38, %55 : vector<8x32xf32>
    %57 = vector.extract_strided_slice %8 {offsets = [0, 16], sizes = [8, 8], strides = [1, 1]} : vector<8x32xf32> to vector<8x8xf32>
    %58 = vector.extract_strided_slice %13 {offsets = [0, 16], sizes = [16, 8], strides = [1, 1]} : vector<16x32xf32> to vector<16x8xf32>
    %59 = vector.extract_strided_slice %18 {offsets = [0, 16], sizes = [16, 8], strides = [1, 1]} : vector<16x32xf32> to vector<16x8xf32>
    %cst_32 = arith.constant dense<0.000000e+00> : vector<8x16xf32>
    %60 = tpu.matmul %57, %58, %cst_32 {dimension_numbers = #tpu.dot_dimension_numbers<[1], [1], [0], [0], [0, 0, 1, 0], [], []>} : vector<8x8xf32>, vector<16x8xf32>, vector<8x16xf32> -> vector<8x16xf32>
    %cst_33 = arith.constant dense<0xFF800000> : vector<8xf32>
    %61 = vector.multi_reduction <maximumf>, %60, %cst_33 [1] : vector<8x16xf32> to vector<8xf32>
    %62 = vector.shape_cast %61 : vector<8xf32> to vector<8x1xf32>
    %63 = vector.broadcast %62 : vector<8x1xf32> to vector<8x16xf32>
    %64 = arith.subf %60, %63 : vector<8x16xf32>
    %65 = math.exp %64 : vector<8x16xf32>
    %cst_34 = arith.constant dense<0.000000e+00> : vector<8xf32>
    %66 = vector.multi_reduction <add>, %65, %cst_34 [1] : vector<8x16xf32> to vector<8xf32>
    %67 = vector.shape_cast %66 : vector<8xf32> to vector<8x1xf32>
    %68 = tpu.reciprocal %67 {approx = true} : vector<8x1xf32> -> vector<8x1xf32>
    %69 = vector.broadcast %68 : vector<8x1xf32> to vector<8x16xf32>
    %70 = arith.mulf %65, %69 : vector<8x16xf32>
    %cst_35 = arith.constant dense<0.000000e+00> : vector<8x8xf32>
    %71 = tpu.matmul %70, %59, %cst_35 {dimension_numbers = #tpu.dot_dimension_numbers<[1], [0], [0], [1], [0, 0, 1, 1], [], []>} : vector<8x16xf32>, vector<16x8xf32>, vector<8x8xf32> -> vector<8x8xf32>
    %72 = vector.extract_strided_slice %19 {offsets = [16, 0], sizes = [8, 32], strides = [1, 1]} : vector<32x32xf32> to vector<8x32xf32>
    %cst_36 = arith.constant dense<0.000000e+00> : vector<8x32xf32>
    %73 = tpu.matmul %71, %72, %cst_36 {dimension_numbers = #tpu.dot_dimension_numbers<[1], [0], [0], [1], [0, 0, 1, 1], [], []>} : vector<8x8xf32>, vector<8x32xf32>, vector<8x32xf32> -> vector<8x32xf32>
    %74 = arith.addf %56, %73 : vector<8x32xf32>
    %75 = vector.extract_strided_slice %8 {offsets = [0, 24], sizes = [8, 8], strides = [1, 1]} : vector<8x32xf32> to vector<8x8xf32>
    %76 = vector.extract_strided_slice %13 {offsets = [0, 24], sizes = [16, 8], strides = [1, 1]} : vector<16x32xf32> to vector<16x8xf32>
    %77 = vector.extract_strided_slice %18 {offsets = [0, 24], sizes = [16, 8], strides = [1, 1]} : vector<16x32xf32> to vector<16x8xf32>
    %cst_37 = arith.constant dense<0.000000e+00> : vector<8x16xf32>
    %78 = tpu.matmul %75, %76, %cst_37 {dimension_numbers = #tpu.dot_dimension_numbers<[1], [1], [0], [0], [0, 0, 1, 0], [], []>} : vector<8x8xf32>, vector<16x8xf32>, vector<8x16xf32> -> vector<8x16xf32>
    %cst_38 = arith.constant dense<0xFF800000> : vector<8xf32>
    %79 = vector.multi_reduction <maximumf>, %78, %cst_38 [1] : vector<8x16xf32> to vector<8xf32>
    %80 = vector.shape_cast %79 : vector<8xf32> to vector<8x1xf32>
    %81 = vector.broadcast %80 : vector<8x1xf32> to vector<8x16xf32>
    %82 = arith.subf %78, %81 : vector<8x16xf32>
    %83 = math.exp %82 : vector<8x16xf32>
    %cst_39 = arith.constant dense<0.000000e+00> : vector<8xf32>
    %84 = vector.multi_reduction <add>, %83, %cst_39 [1] : vector<8x16xf32> to vector<8xf32>
    %85 = vector.shape_cast %84 : vector<8xf32> to vector<8x1xf32>
    %86 = tpu.reciprocal %85 {approx = true} : vector<8x1xf32> -> vector<8x1xf32>
    %87 = vector.broadcast %86 : vector<8x1xf32> to vector<8x16xf32>
    %88 = arith.mulf %83, %87 : vector<8x16xf32>
    %cst_40 = arith.constant dense<0.000000e+00> : vector<8x8xf32>
    %89 = tpu.matmul %88, %77, %cst_40 {dimension_numbers = #tpu.dot_dimension_numbers<[1], [0], [0], [1], [0, 0, 1, 1], [], []>} : vector<8x16xf32>, vector<16x8xf32>, vector<8x8xf32> -> vector<8x8xf32>
    %90 = vector.extract_strided_slice %19 {offsets = [24, 0], sizes = [8, 32], strides = [1, 1]} : vector<32x32xf32> to vector<8x32xf32>
    %cst_41 = arith.constant dense<0.000000e+00> : vector<8x32xf32>
    %91 = tpu.matmul %89, %90, %cst_41 {dimension_numbers = #tpu.dot_dimension_numbers<[1], [0], [0], [1], [0, 0, 1, 1], [], []>} : vector<8x8xf32>, vector<8x32xf32>, vector<8x32xf32> -> vector<8x32xf32>
    %92 = arith.addf %74, %91 : vector<8x32xf32>
    %c0_42 = arith.constant 0 : index
    %c0_43 = arith.constant 0 : index
    %93 = vector.load %arg10[%c0_42, %c0_43] : memref<1x32xf32, #tpu.memory_space<vmem>>, vector<1x32xf32>
    %94 = vector.broadcast %93 : vector<1x32xf32> to vector<8x32xf32>
    %95 = arith.addf %92, %94 : vector<8x32xf32>
    %c0_44 = arith.constant 0 : index
    %c0_45 = arith.constant 0 : index
    %c0_46 = arith.constant 0 : index
    %96 = vector.load %arg11[%c0_44, %c0_45, %c0_46] : memref<1x8x32xf32, #tpu.memory_space<vmem>>, vector<1x8x32xf32>
    %97 = vector.shape_cast %96 : vector<1x8x32xf32> to vector<8x32xf32>
    %98 = vector.shape_cast %95 : vector<8x32xf32> to vector<1x8x32xf32>
    tpu.vector_store %arg11[%c0_44, %c0_45, %c0_46], %98 {strides = array<i32>} : memref<1x8x32xf32, #tpu.memory_space<vmem>>, vector<1x8x32xf32>,
    return
  }
  func.func @transform_0(%arg0: i32) -> (i32, i32, i32) {
    %c0_i32 = arith.constant 0 : i32
    %c0_i32_0 = arith.constant 0 : i32
    %c0_i32_1 = arith.constant 0 : i32
    return %arg0, %c0_i32, %c0_i32_0 : i32, i32, i32
  }
  func.func @transform_1(%arg0: i32) -> (i32, i32, i32) {
    %c0_i32 = arith.constant 0 : i32
    %c0_i32_0 = arith.constant 0 : i32
    %c0_i32_1 = arith.constant 0 : i32
    return %arg0, %c0_i32, %c0_i32_0 : i32, i32, i32
  }
  func.func @transform_2(%arg0: i32) -> (i32, i32) {
    %c0_i32 = arith.constant 0 : i32
    %c0_i32_0 = arith.constant 0 : i32
    %c0_i32_1 = arith.constant 0 : i32
    return %c0_i32, %c0_i32_0 : i32, i32
  }
  func.func @transform_3(%arg0: i32) -> (i32, i32) {
    %c0_i32 = arith.constant 0 : i32
    %c0_i32_0 = arith.constant 0 : i32
    %c0_i32_1 = arith.constant 0 : i32
    return %c0_i32, %c0_i32_0 : i32, i32
  }
  func.func @transform_4(%arg0: i32) -> (i32, i32) {
    %c0_i32 = arith.constant 0 : i32
    %c0_i32_0 = arith.constant 0 : i32
    %c0_i32_1 = arith.constant 0 : i32
    return %c0_i32, %c0_i32_0 : i32, i32
  }
  func.func @transform_5(%arg0: i32) -> (i32, i32) {
    %c0_i32 = arith.constant 0 : i32
    %c0_i32_0 = arith.constant 0 : i32
    %c0_i32_1 = arith.constant 0 : i32
    return %c0_i32, %c0_i32_0 : i32, i32
  }
  func.func @transform_6(%arg0: i32) -> (i32, i32) {
    %c0_i32 = arith.constant 0 : i32
    %c0_i32_0 = arith.constant 0 : i32
    %c0_i32_1 = arith.constant 0 : i32
    return %c0_i32, %c0_i32_0 : i32, i32
  }
  func.func @transform_7(%arg0: i32) -> (i32, i32) {
    %c0_i32 = arith.constant 0 : i32
    %c0_i32_0 = arith.constant 0 : i32
    %c0_i32_1 = arith.constant 0 : i32
    return %c0_i32, %c0_i32_0 : i32, i32
  }
  func.func @transform_8(%arg0: i32) -> (i32, i32) {
    %c0_i32 = arith.constant 0 : i32
    %c0_i32_0 = arith.constant 0 : i32
    %c0_i32_1 = arith.constant 0 : i32
    return %c0_i32, %c0_i32_0 : i32, i32
  }
  func.func @transform_9(%arg0: i32) -> (i32, i32) {
    %c0_i32 = arith.constant 0 : i32
    %c0_i32_0 = arith.constant 0 : i32
    %c0_i32_1 = arith.constant 0 : i32
    return %c0_i32, %c0_i32_0 : i32, i32
  }
  func.func @transform_10(%arg0: i32) -> (i32, i32, i32) {
    %c0_i32 = arith.constant 0 : i32
    %c0_i32_0 = arith.constant 0 : i32
    %c0_i32_1 = arith.constant 0 : i32
    return %arg0, %c0_i32, %c0_i32_0 : i32, i32, i32
  }
}

</mosaic_0001>

<llo_original>
// kernel: cross_attention.1
$region0: #{cross_attention.1}
  #allocation0 [shape = 'u32[]', space=smem, size = 0x4, offset = 0x4, fixed_abs, tag = 'smem constant byte address 0x4 - core index']
  #allocation1 [shape = 'u32[144,128]{1,0:T(1,128)}', space=vmem, size = 0x12000, scoped, tag = 'internal scratch']
  %s0 = inlined_call_operand.vmem [shape: f32[2,8,32], index: 0, kind: input, shape index: {}]
  %s1 = inlined_call_operand.vmem [shape: f32[2,16,32], index: 1, kind: input, shape index: {}]
  %s2 = inlined_call_operand.vmem [shape: f32[32,32], index: 2, kind: input, shape index: {}]
  %s3 = inlined_call_operand.vmem [shape: f32[1,32], index: 3, kind: input, shape index: {}]
  %s4 = inlined_call_operand.vmem [shape: f32[32,32], index: 4, kind: input, shape index: {}]
  %s5 = inlined_call_operand.vmem [shape: f32[1,32], index: 5, kind: input, shape index: {}]
  %s6 = inlined_call_operand.vmem [shape: f32[32,32], index: 6, kind: input, shape index: {}]
  %s7 = inlined_call_operand.vmem [shape: f32[1,32], index: 7, kind: input, shape index: {}]
  %s8 = inlined_call_operand.vmem [shape: f32[32,32], index: 8, kind: input, shape index: {}]
  %s9 = inlined_call_operand.vmem [shape: f32[1,32], index: 9, kind: input, shape index: {}]
  %s10 = inlined_call_operand.hbm [shape: f32[2,8,32], index: 10, kind: output, shape index: {}]
  %s11 = sld [smem:[#allocation0]]
  $region73: #{cross_attention.1} parent=0
    _
  %s13 = ssub.s32 1, %s11
  %s14 = scalar_select 0, %s13, %s11
  $region1: #{cross_attention.1} parent=0
    #allocation2 [shape = 'u8[8192]{0}', space=vmem, size = 0x2000, scoped, tag = 'output window, operand 0']
    #allocation3 [shape = 's32[2]{0}', space=sflag, size = 0x8, scoped, tag = 'scoped memory for cross_attention.1']
    %15 = vsyncpa [#allocation3], 0
    %s16 = scalar_lea.sflag [#allocation3], 1
    %17 = vsyncpa %s16, 0
    loop: start=0, step=1, limit=4
    $region2: #{cross_attention.1} parent=1 // loop_pre_header
      _
    $region3: #{cross_attention.1} parent=1 // loop_header
      %s19 = sphi 0, %s23
      %p20 = scmp.ge.s32.totalorder %s19, 4
      %s29 = sphi 0, %s31
      %s32 = sphi 0, %s29
      %s33 = sphi 0, %s32
      %s49 = sphi 0, %s33
      %s55 = sphi 0, %s57
      %s58 = sphi 0, %s55
      %s59 = sphi 0, %s58
      %s75 = sphi 0, %s59
      %s79 = sphi 0, %s79
      %s81 = sphi 0, %s79
      %s82 = sphi 0, %s81
      %s96 = sphi 0, %s82
      %s100 = sphi 0, %s100
      %s102 = sphi 0, %s100
      %s103 = sphi 0, %s102
      %s117 = sphi 0, %s103
      %s121 = sphi 0, %s121
      %s123 = sphi 0, %s121
      %s124 = sphi 0, %s123
      %s138 = sphi 0, %s124
      %s142 = sphi 0, %s142
      %s144 = sphi 0, %s142
      %s145 = sphi 0, %s144
      %s159 = sphi 0, %s145
      %s163 = sphi 0, %s163
      %s165 = sphi 0, %s163
      %s166 = sphi 0, %s165
      %s180 = sphi 0, %s166
      %s184 = sphi 0, %s184
      %s186 = sphi 0, %s184
      %s187 = sphi 0, %s186
      %s201 = sphi 0, %s187
      %s205 = sphi 0, %s205
      %s207 = sphi 0, %s205
      %s208 = sphi 0, %s207
      %s222 = sphi 0, %s208
      %s226 = sphi 0, %s226
      %s228 = sphi 0, %s226
      %s229 = sphi 0, %s228
      %s243 = sphi 0, %s229
      %s249 = sphi 0, %s251
      %s252 = sphi 0, %s249
      %s253 = sphi 0, %s252
      %s269 = sphi 0, %s253
    $region4: #{cross_attention.1} parent=1 // loop_header_branch
      %22 = sbr.rel (%p20) target = $region8
    $region5: #{cross_attention.1} parent=1 // loop_body
      %s24 = ssub.s32 %s19, 1
      %s25 = ssub.s32 %s19, 2
      %s26 = sadd.s32 %s19, 1
      %s27 = ssub.s32 %s19, %s26
      %p28 = scmp.eq.s32.totalorder %s27, 0
      %s30 = sadd.s32 %s29, 1
      %s31 = scalar_select %p28, %s29, %s30
      %p34 = pneg %p28
      %p35 = scmp.eq.s32.totalorder %s19, 1
      %p36 = por %p34, %p35
      %p37 = scmp.ne.s32.totalorder %s29, %s32
      %p38 = scmp.eq.s32.totalorder %s19, 0
      %p39 = por %p37, %p38
      %p40 = scmp.ne.s32.totalorder %s29, %s32
      %p41 = scmp.eq.s32.totalorder %s24, 1
      %p42 = por %p40, %p41
      %p43 = scmp.ne.s32.totalorder %s32, %s33
      %p44 = scmp.eq.s32.totalorder %s24, 0
      %p45 = por %p43, %p44
      %p46 = scmp.ne.s32.totalorder %s32, %s33
      %p47 = scmp.eq.s32.totalorder %s25, 1
      %p48 = por %p46, %p47
      %p50 = scmp.ne.s32.totalorder %s33, %s49
      %p51 = scmp.eq.s32.totalorder %s25, 0
      %p52 = por %p50, %p51
      %s53 = ssub.s32 %s19, %s26
      %p54 = scmp.eq.s32.totalorder %s53, 0
      %s56 = sadd.s32 %s55, 1
      %s57 = scalar_select %p54, %s55, %s56
      %p60 = pneg %p54
      %p61 = scmp.eq.s32.totalorder %s19, 1
      %p62 = por %p60, %p61
      %p63 = scmp.ne.s32.totalorder %s55, %s58
      %p64 = scmp.eq.s32.totalorder %s19, 0
      %p65 = por %p63, %p64
      %p66 = scmp.ne.s32.totalorder %s55, %s58
      %p67 = scmp.eq.s32.totalorder %s24, 1
      %p68 = por %p66, %p67
      %p69 = scmp.ne.s32.totalorder %s58, %s59
      %p70 = scmp.eq.s32.totalorder %s24, 0
      %p71 = por %p69, %p70
      %p72 = scmp.ne.s32.totalorder %s58, %s59
      %p73 = scmp.eq.s32.totalorder %s25, 1
      %p74 = por %p72, %p73
      %p76 = scmp.ne.s32.totalorder %s59, %s75
      %p77 = scmp.eq.s32.totalorder %s25, 0
      %p78 = por %p76, %p77
      %s80 = sadd.s32 %s79, 1
      %p83 = scmp.eq.s32.totalorder %s19, 1
      %p84 = scmp.ne.s32.totalorder %s79, %s81
      %p85 = scmp.eq.s32.totalorder %s19, 0
      %p86 = por %p84, %p85
      %p87 = scmp.ne.s32.totalorder %s79, %s81
      %p88 = scmp.eq.s32.totalorder %s24, 1
      %p89 = por %p87, %p88
      %p90 = scmp.ne.s32.totalorder %s81, %s82
      %p91 = scmp.eq.s32.totalorder %s24, 0
      %p92 = por %p90, %p91
      %p93 = scmp.ne.s32.totalorder %s81, %s82
      %p94 = scmp.eq.s32.totalorder %s25, 1
      %p95 = por %p93, %p94
      %p97 = scmp.ne.s32.totalorder %s82, %s96
      %p98 = scmp.eq.s32.totalorder %s25, 0
      %p99 = por %p97, %p98
      %s101 = sadd.s32 %s100, 1
      %p104 = scmp.eq.s32.totalorder %s19, 1
      %p105 = scmp.ne.s32.totalorder %s100, %s102
      %p106 = scmp.eq.s32.totalorder %s19, 0
      %p107 = por %p105, %p106
      %p108 = scmp.ne.s32.totalorder %s100, %s102
      %p109 = scmp.eq.s32.totalorder %s24, 1
      %p110 = por %p108, %p109
      %p111 = scmp.ne.s32.totalorder %s102, %s103
      %p112 = scmp.eq.s32.totalorder %s24, 0
      %p113 = por %p111, %p112
      %p114 = scmp.ne.s32.totalorder %s102, %s103
      %p115 = scmp.eq.s32.totalorder %s25, 1
      %p116 = por %p114, %p115
      %p118 = scmp.ne.s32.totalorder %s103, %s117
      %p119 = scmp.eq.s32.totalorder %s25, 0
      %p120 = por %p118, %p119
      %s122 = sadd.s32 %s121, 1
      %p125 = scmp.eq.s32.totalorder %s19, 1
      %p126 = scmp.ne.s32.totalorder %s121, %s123
      %p127 = scmp.eq.s32.totalorder %s19, 0
      %p128 = por %p126, %p127
      %p129 = scmp.ne.s32.totalorder %s121, %s123
      %p130 = scmp.eq.s32.totalorder %s24, 1
      %p131 = por %p129, %p130
      %p132 = scmp.ne.s32.totalorder %s123, %s124
      %p133 = scmp.eq.s32.totalorder %s24, 0
      %p134 = por %p132, %p133
      %p135 = scmp.ne.s32.totalorder %s123, %s124
      %p136 = scmp.eq.s32.totalorder %s25, 1
      %p137 = por %p135, %p136
      %p139 = scmp.ne.s32.totalorder %s124, %s138
      %p140 = scmp.eq.s32.totalorder %s25, 0
      %p141 = por %p139, %p140
      %s143 = sadd.s32 %s142, 1
      %p146 = scmp.eq.s32.totalorder %s19, 1
      %p147 = scmp.ne.s32.totalorder %s142, %s144
      %p148 = scmp.eq.s32.totalorder %s19, 0
      %p149 = por %p147, %p148
      %p150 = scmp.ne.s32.totalorder %s142, %s144
      %p151 = scmp.eq.s32.totalorder %s24, 1
      %p152 = por %p150, %p151
      %p153 = scmp.ne.s32.totalorder %s144, %s145
      %p154 = scmp.eq.s32.totalorder %s24, 0
      %p155 = por %p153, %p154
      %p156 = scmp.ne.s32.totalorder %s144, %s145
      %p157 = scmp.eq.s32.totalorder %s25, 1
      %p158 = por %p156, %p157
      %p160 = scmp.ne.s32.totalorder %s145, %s159
      %p161 = scmp.eq.s32.totalorder %s25, 0
      %p162 = por %p160, %p161
      %s164 = sadd.s32 %s163, 1
      %p167 = scmp.eq.s32.totalorder %s19, 1
      %p168 = scmp.ne.s32.totalorder %s163, %s165
      %p169 = scmp.eq.s32.totalorder %s19, 0
      %p170 = por %p168, %p169
      %p171 = scmp.ne.s32.totalorder %s163, %s165
      %p172 = scmp.eq.s32.totalorder %s24, 1
      %p173 = por %p171, %p172
      %p174 = scmp.ne.s32.totalorder %s165, %s166
      %p175 = scmp.eq.s32.totalorder %s24, 0
      %p176 = por %p174, %p175
      %p177 = scmp.ne.s32.totalorder %s165, %s166
      %p178 = scmp.eq.s32.totalorder %s25, 1
      %p179 = por %p177, %p178
      %p181 = scmp.ne.s32.totalorder %s166, %s180
      %p182 = scmp.eq.s32.totalorder %s25, 0
      %p183 = por %p181, %p182
      %s185 = sadd.s32 %s184, 1
      %p188 = scmp.eq.s32.totalorder %s19, 1
      %p189 = scmp.ne.s32.totalorder %s184, %s186
      %p190 = scmp.eq.s32.totalorder %s19, 0
      %p191 = por %p189, %p190
      %p192 = scmp.ne.s32.totalorder %s184, %s186
      %p193 = scmp.eq.s32.totalorder %s24, 1
      %p194 = por %p192, %p193
      %p195 = scmp.ne.s32.totalorder %s186, %s187
      %p196 = scmp.eq.s32.totalorder %s24, 0
      %p197 = por %p195, %p196
      %p198 = scmp.ne.s32.totalorder %s186, %s187
      %p199 = scmp.eq.s32.totalorder %s25, 1
      %p200 = por %p198, %p199
      %p202 = scmp.ne.s32.totalorder %s187, %s201
      %p203 = scmp.eq.s32.totalorder %s25, 0
      %p204 = por %p202, %p203
      %s206 = sadd.s32 %s205, 1
      %p209 = scmp.eq.s32.totalorder %s19, 1
      %p210 = scmp.ne.s32.totalorder %s205, %s207
      %p211 = scmp.eq.s32.totalorder %s19, 0
      %p212 = por %p210, %p211
      %p213 = scmp.ne.s32.totalorder %s205, %s207
      %p214 = scmp.eq.s32.totalorder %s24, 1
      %p215 = por %p213, %p214
      %p216 = scmp.ne.s32.totalorder %s207, %s208
      %p217 = scmp.eq.s32.totalorder %s24, 0
      %p218 = por %p216, %p217
      %p219 = scmp.ne.s32.totalorder %s207, %s208
      %p220 = scmp.eq.s32.totalorder %s25, 1
      %p221 = por %p219, %p220
      %p223 = scmp.ne.s32.totalorder %s208, %s222
      %p224 = scmp.eq.s32.totalorder %s25, 0
      %p225 = por %p223, %p224
      %s227 = sadd.s32 %s226, 1
      %p230 = scmp.eq.s32.totalorder %s19, 1
      %p231 = scmp.ne.s32.totalorder %s226, %s228
      %p232 = scmp.eq.s32.totalorder %s19, 0
      %p233 = por %p231, %p232
      %p234 = scmp.ne.s32.totalorder %s226, %s228
      %p235 = scmp.eq.s32.totalorder %s24, 1
      %p236 = por %p234, %p235
      %p237 = scmp.ne.s32.totalorder %s228, %s229
      %p238 = scmp.eq.s32.totalorder %s24, 0
      %p239 = por %p237, %p238
      %p240 = scmp.ne.s32.totalorder %s228, %s229
      %p241 = scmp.eq.s32.totalorder %s25, 1
      %p242 = por %p240, %p241
      %p244 = scmp.ne.s32.totalorder %s229, %s243
      %p245 = scmp.eq.s32.totalorder %s25, 0
      %p246 = por %p244, %p245
      %s247 = ssub.s32 %s19, %s26
      %p248 = scmp.eq.s32.totalorder %s247, 0
      %s250 = sadd.s32 %s249, 1
      %s251 = scalar_select %p248, %s249, %s250
      %p254 = pneg %p248
      %p255 = scmp.eq.s32.totalorder %s19, 1
      %p256 = por %p254, %p255
      %p257 = scmp.ne.s32.totalorder %s249, %s252
      %p258 = scmp.eq.s32.totalorder %s19, 0
      %p259 = por %p257, %p258
      %p260 = scmp.ne.s32.totalorder %s249, %s252
      %p261 = scmp.eq.s32.totalorder %s24, 1
      %p262 = por %p260, %p261
      %p263 = scmp.ne.s32.totalorder %s252, %s253
      %p264 = scmp.eq.s32.totalorder %s24, 0
      %p265 = por %p263, %p264
      %p266 = scmp.ne.s32.totalorder %s252, %s253
      %p267 = scmp.eq.s32.totalorder %s25, 1
      %p268 = por %p266, %p267
      %p270 = scmp.ne.s32.totalorder %s253, %s269
      %p271 = scmp.eq.s32.totalorder %s25, 0
      %p272 = por %p270, %p271
      %p273 = scmp.le.s32.totalorder 1, %s19
      %p274 = scmp.lt.s32.totalorder %s19, 3
      %p275 = pnand %p273, %p274
      %p276 = pneg %p275
      // Predicated region
      $region9: #{cross_attention.1} parent=5 // pred_check
        _
      $region10: #{cross_attention.1} parent=5 // pred_check_branch
        %278 = sbr.rel (%p275) target = $region12
      $region11: #{cross_attention.1} parent=5 // pred_region
        %s279 = ssub.s32 %s19, 1
        // Predicated region
        $region13: #{cross_attention.1} parent=11 // pred_check
          %p280 = pneg %p92
        $region14: #{cross_attention.1} parent=11 // pred_check_branch
          %282 = sbr.rel (%p280) target = $region16
        $region15: #{cross_attention.1} parent=11 // pred_region
          _
        $region16: #{cross_attention.1} parent=11 // pred_fallthru
          _
        // Predicated region
        $region17: #{cross_attention.1} parent=11 // pred_check
          %p283 = pneg %p113
        $region18: #{cross_attention.1} parent=11 // pred_check_branch
          %285 = sbr.rel (%p283) target = $region20
        $region19: #{cross_attention.1} parent=11 // pred_region
          _
        $region20: #{cross_attention.1} parent=11 // pred_fallthru
          _
        // Predicated region
        $region21: #{cross_attention.1} parent=11 // pred_check
          %p286 = pneg %p134
        $region22: #{cross_attention.1} parent=11 // pred_check_branch
          %288 = sbr.rel (%p286) target = $region24
        $region23: #{cross_attention.1} parent=11 // pred_region
          _
        $region24: #{cross_attention.1} parent=11 // pred_fallthru
          _
        // Predicated region
        $region25: #{cross_attention.1} parent=11 // pred_check
          %p289 = pneg %p155
        $region26: #{cross_attention.1} parent=11 // pred_check_branch
          %291 = sbr.rel (%p289) target = $region28
        $region27: #{cross_attention.1} parent=11 // pred_region
          _
        $region28: #{cross_attention.1} parent=11 // pred_fallthru
          _
        // Predicated region
        $region29: #{cross_attention.1} parent=11 // pred_check
          %p292 = pneg %p176
        $region30: #{cross_attention.1} parent=11 // pred_check_branch
          %294 = sbr.rel (%p292) target = $region32
        $region31: #{cross_attention.1} parent=11 // pred_region
          _
        $region32: #{cross_attention.1} parent=11 // pred_fallthru
          _
        // Predicated region
        $region33: #{cross_attention.1} parent=11 // pred_check
          %p295 = pneg %p197
        $region34: #{cross_attention.1} parent=11 // pred_check_branch
          %297 = sbr.rel (%p295) target = $region36
        $region35: #{cross_attention.1} parent=11 // pred_region
          _
        $region36: #{cross_attention.1} parent=11 // pred_fallthru
          _
        // Predicated region
        $region37: #{cross_attention.1} parent=11 // pred_check
          %p298 = pneg %p218
        $region38: #{cross_attention.1} parent=11 // pred_check_branch
          %300 = sbr.rel (%p298) target = $region40
        $region39: #{cross_attention.1} parent=11 // pred_region
          _
        $region40: #{cross_attention.1} parent=11 // pred_fallthru
          _
        // Predicated region
        $region41: #{cross_attention.1} parent=11 // pred_check
          %p301 = pneg %p239
        $region42: #{cross_attention.1} parent=11 // pred_check_branch
          %303 = sbr.rel (%p301) target = $region44
        $region43: #{cross_attention.1} parent=11 // pred_region
          _
        $region44: #{cross_attention.1} parent=11 // pred_fallthru
          _
      $region12: #{cross_attention.1} parent=5 // pred_fallthru
        _
      %p304 = scmp.lt.s32.totalorder %s19, 2
      // Predicated region
      $region45: #{cross_attention.1} parent=5 // pred_check
        %p305 = pneg %p304
      $region46: #{cross_attention.1} parent=5 // pred_check_branch
        %307 = sbr.rel (%p305) target = $region48
      $region47: #{cross_attention.1} parent=5 // pred_region
        // Predicated region
        $region49: #{cross_attention.1} parent=47 // pred_check
          %p308 = pneg %p39
        $region50: #{cross_attention.1} parent=47 // pred_check_branch
          %310 = sbr.rel (%p308) target = $region52
        $region51: #{cross_attention.1} parent=47 // pred_region
          %p311 = scmp.lt.s32.totalorder %s19, 1
          %s312 = scalar_select %p311, %s19, 1
          %s313 = smul.addr %s312, 8
          %s314 = scalar_lea.vmem %s0, %s313
        $region52: #{cross_attention.1} parent=47 // pred_fallthru
          _
        // Predicated region
        $region53: #{cross_attention.1} parent=47 // pred_check
          %p315 = pneg %p65
        $region54: #{cross_attention.1} parent=47 // pred_check_branch
          %317 = sbr.rel (%p315) target = $region56
        $region55: #{cross_attention.1} parent=47 // pred_region
          %p318 = scmp.lt.s32.totalorder %s19, 1
          %s319 = scalar_select %p318, %s19, 1
          %s320 = smul.addr %s319, 2
          %s321 = smul.addr %s320, 8
          %s322 = scalar_lea.vmem %s1, %s321
        $region56: #{cross_attention.1} parent=47 // pred_fallthru
          _
      $region48: #{cross_attention.1} parent=5 // pred_fallthru
        _
      %p323 = scmp.le.s32.totalorder 1, %s19
      %p324 = scmp.lt.s32.totalorder %s19, 3
      %p325 = pnand %p323, %p324
      %p326 = pneg %p325
      // Predicated region
      $region57: #{cross_attention.1} parent=5 // pred_check
        _
      $region58: #{cross_attention.1} parent=5 // pred_check_branch
        %328 = sbr.rel (%p325) target = $region60
      $region59: #{cross_attention.1} parent=5 // pred_region
        %s329 = ssub.s32 %s19, 1
        %p330 = scmp.lt.s32.totalorder %s24, 1
        %s331 = scalar_select %p330, %s24, 1
        %s332 = smul.addr %s331, 8
        %s333 = scalar_lea.vmem %s0, %s332
        %p334 = pneg %p45
        %p335 = pneg %p42
        %p336 = scmp.lt.s32.totalorder %s24, 1
        %s337 = scalar_select %p336, %s24, 1
        %s338 = smul.addr %s337, 2
        %s339 = smul.addr %s338, 8
        %s340 = scalar_lea.vmem %s1, %s339
        %p341 = pneg %p71
        %p342 = pneg %p68
        %p343 = pneg %p92
        %p344 = pneg %p89
        %p345 = pneg %p113
        %p346 = pneg %p110
        %p347 = pneg %p134
        %p348 = pneg %p131
        %p349 = pneg %p155
        %p350 = pneg %p152
        %p351 = pneg %p176
        %p352 = pneg %p173
        %p353 = pneg %p197
        %p354 = pneg %p194
        %p355 = pneg %p218
        %p356 = pneg %p215
        %p357 = pneg %p239
        %p358 = pneg %p236
        %p359 = pneg %p265
        %p360 = pneg %p262
        %s361 = sand.u32 %s252, 1
        %s362 = scalar_lea.sflag [#allocation3], %s361
        %s363 = sand.u32 %s252, 1
        %s364 = smul.addr %s363, 8
        %s365 = scalar_lea.vmem [#allocation2], %s364
        %p366 = scmp.lt.s32.totalorder %s24, 1
        %s367 = scalar_select %p366, %s24, 1
        %s368 = smul.addr %s367, 8
        %s369 = scalar_lea.vmem %s0, %s368
        %p370 = scmp.lt.s32.totalorder %s24, 1
        %s371 = scalar_select %p370, %s24, 1
        %s372 = smul.addr %s371, 2
        %s373 = smul.addr %s372, 8
        %s374 = scalar_lea.vmem %s1, %s373
        %v375 = vld [vmem:[%s369] sm:$0xff]
        %v376 = vld [vmem:[%s374] sm:$0xff]
        %v377 = vld [vmem:[%s374 + $0x8] sm:$0xff]
        %v378 = vld [vmem:[%s2] sm:$0xff]
        %v379 = vld [vmem:[%s2 + $0x8] sm:$0xff]
        %v380 = vld [vmem:[%s2 + $0x10] sm:$0xff]
        %v381 = vld [vmem:[%s2 + $0x18] sm:$0xff]
        %v382 = vld [vmem:[%s3] sm:$0x1]
        %v384 = vlaneseq
        %v385 = vshrl.u32 %v384, 7
        %v386 = vsub.s32 0, %v385
        %v387 = vrot.slane %v382, %v386
        %vm389 = vcmask 261120
        %v391 = vsel %vm389, %v375, 0
        %393 = vmatprep.subr.mxu0 0.0
        %394 = vmatpush1.msra.mxu0 %v378
        %395 = vmatprep.subr.mxu0 0.0
        %396 = vmatpush1.msra.mxu0 %v379
        %397 = vmatprep.subr.mxu0 0.0
        %398 = vmatpush1.msra.mxu0 %v380
        %399 = vmatprep.subr.mxu0 0.0
        %400 = vmatpush1.msra.mxu0 %v381
        %401 = vmatprep.subr.mxu0 0.0
        %402 = vmatpush1.msra.mxu0 0.0
        %403 = vmatprep.subr.mxu0 0.0
        %404 = vmatpush1.msra.mxu0 0.0
        %405 = vmatprep.subr.mxu0 0.0
        %406 = vmatpush1.msra.mxu0 0.0
        %407 = vmatprep.subr.mxu0 0.0
        %408 = vmatpush1.msra.mxu0 0.0
        %409 = vmatprep.subr.mxu0 0.0
        %410 = vmatpush1.msra.mxu0 0.0
        %411 = vmatprep.subr.mxu0 0.0
        %412 = vmatpush1.msra.mxu0 0.0
        %413 = vmatprep.subr.mxu0 0.0
        %414 = vmatpush1.msra.mxu0 0.0
        %415 = vmatprep.subr.mxu0 0.0
        %416 = vmatpush1.msra.mxu0 0.0
        %417 = vmatprep.subr.mxu0 0.0
        %418 = vmatpush1.msra.mxu0 0.0
        %419 = vmatprep.subr.mxu0 0.0
        %420 = vmatpush1.msra.mxu0 0.0
        %421 = vmatprep.subr.mxu0 0.0
        %422 = vmatpush1.msra.mxu0 0.0
        %423 = vmatprep.subr.mxu0 0.0
        %424 = vmatpush1.msra.mxu0 0.0
        %425 = vmatprep.subr.mxu0 0.0
        %426 = vmatpush1.msra.mxu0 0.0
        %427 = vmatprep.subr.mxu0 0.0
        %428 = vmatpush1.msra.mxu0 0.0
        %429 = vmatprep.subr.mxu0 0.0
        %430 = vmatpush1.msra.mxu0 0.0
        %431 = vmatprep.subr.mxu0 0.0
        %432 = vmatpush1.msra.mxu0 0.0
        %433 = vmatprep.subr.mxu0 0.0
        %434 = vmatpush1.msra.mxu0 0.0
        %435 = vmatprep.subr.mxu0 0.0
        %436 = vmatpush1.msra.mxu0 0.0
        %437 = vmatprep.subr.mxu0 0.0
        %438 = vmatpush1.msra.mxu0 0.0
        %439 = vmatprep.subr.mxu0 0.0
        %440 = vmatpush1.msra.mxu0 0.0
        %441 = vmatprep.subr.mxu0 0.0
        %442 = vmatpush1.msra.mxu0 0.0
        %443 = vmatprep.subr.mxu0 0.0
        %444 = vmatpush1.msra.mxu0 0.0
        %445 = vmatprep.subr.mxu0 0.0
        %446 = vmatpush1.msra.mxu0 0.0
        %447 = vmatprep.subr.mxu0 0.0
        %448 = vmatpush1.msra.mxu0 0.0
        %449 = vmatprep.subr.mxu0 0.0
        %450 = vmatpush1.msra.mxu0 0.0
        %451 = vmatprep.subr.mxu0 0.0
        %452 = vmatpush1.msra.mxu0 0.0
        %453 = vmatprep.subr.mxu0 0.0
        %454 = vmatpush1.msra.mxu0 0.0
        %455 = vmatprep.subr.mxu0 0.0
        %456 = vmatpush1.msra.mxu0 0.0
        %457 = vmatprep.mubr.f32.mxu0 0.0
        %458 = vmatmul.mubr.f32.gmra.mrb[0].mxu0 %v391
        %v459 = vpop.f32.mrb[0].mxu0
        %v460 = vadd.f32 %v387, %v459
        %v461 = vpop.f32.mrb[0].mxu0
        %462 = vdwg.mxu0
        %v463 = vld [vmem:[%s4] sm:$0xff]
        %v464 = vld [vmem:[%s4 + $0x8] sm:$0xff]
        %v465 = vld [vmem:[%s4 + $0x10] sm:$0xff]
        %v466 = vld [vmem:[%s4 + $0x18] sm:$0xff]
        %v467 = vld [vmem:[%s5] sm:$0x1]
        %v469 = vlaneseq
        %v470 = vshrl.u32 %v469, 7
        %v471 = vsub.s32 0, %v470
        %v472 = vrot.slane %v467, %v471
        %v475 = vsel %vm389, %v376, 0
        %v478 = vsel %vm389, %v377, 0
        %480 = vmatprep.subr.mxu0 0.0
        %481 = vmatpush1.msra.mxu0 %v463
        %482 = vmatprep.subr.mxu0 0.0
        %483 = vmatpush1.msra.mxu0 %v464
        %484 = vmatprep.subr.mxu0 0.0
        %485 = vmatpush1.msra.mxu0 %v465
        %486 = vmatprep.subr.mxu0 0.0
        %487 = vmatpush1.msra.mxu0 %v466
        %488 = vmatprep.subr.mxu0 0.0
        %489 = vmatpush1.msra.mxu0 0.0
        %490 = vmatprep.subr.mxu0 0.0
        %491 = vmatpush1.msra.mxu0 0.0
        %492 = vmatprep.subr.mxu0 0.0
        %493 = vmatpush1.msra.mxu0 0.0
        %494 = vmatprep.subr.mxu0 0.0
        %495 = vmatpush1.msra.mxu0 0.0
        %496 = vmatprep.subr.mxu0 0.0
        %497 = vmatpush1.msra.mxu0 0.0
        %498 = vmatprep.subr.mxu0 0.0
        %499 = vmatpush1.msra.mxu0 0.0
        %500 = vmatprep.subr.mxu0 0.0
        %501 = vmatpush1.msra.mxu0 0.0
        %502 = vmatprep.subr.mxu0 0.0
        %503 = vmatpush1.msra.mxu0 0.0
        %504 = vmatprep.subr.mxu0 0.0
        %505 = vmatpush1.msra.mxu0 0.0
        %506 = vmatprep.subr.mxu0 0.0
        %507 = vmatpush1.msra.mxu0 0.0
        %508 = vmatprep.subr.mxu0 0.0
        %509 = vmatpush1.msra.mxu0 0.0
        %510 = vmatprep.subr.mxu0 0.0
        %511 = vmatpush1.msra.mxu0 0.0
        %512 = vmatprep.subr.mxu0 0.0
        %513 = vmatpush1.msra.mxu0 0.0
        %514 = vmatprep.subr.mxu0 0.0
        %515 = vmatpush1.msra.mxu0 0.0
        %516 = vmatprep.subr.mxu0 0.0
        %517 = vmatpush1.msra.mxu0 0.0
        %518 = vmatprep.subr.mxu0 0.0
        %519 = vmatpush1.msra.mxu0 0.0
        %520 = vmatprep.subr.mxu0 0.0
        %521 = vmatpush1.msra.mxu0 0.0
        %522 = vmatprep.subr.mxu0 0.0
        %523 = vmatpush1.msra.mxu0 0.0
        %524 = vmatprep.subr.mxu0 0.0
        %525 = vmatpush1.msra.mxu0 0.0
        %526 = vmatprep.subr.mxu0 0.0
        %527 = vmatpush1.msra.mxu0 0.0
        %528 = vmatprep.subr.mxu0 0.0
        %529 = vmatpush1.msra.mxu0 0.0
        %530 = vmatprep.subr.mxu0 0.0
        %531 = vmatpush1.msra.mxu0 0.0
        %532 = vmatprep.subr.mxu0 0.0
        %533 = vmatpush1.msra.mxu0 0.0
        %534 = vmatprep.subr.mxu0 0.0
        %535 = vmatpush1.msra.mxu0 0.0
        %536 = vmatprep.subr.mxu0 0.0
        %537 = vmatpush1.msra.mxu0 0.0
        %538 = vmatprep.subr.mxu0 0.0
        %539 = vmatpush1.msra.mxu0 0.0
        %540 = vmatprep.subr.mxu0 0.0
        %541 = vmatpush1.msra.mxu0 0.0
        %542 = vmatprep.subr.mxu0 0.0
        %543 = vmatpush1.msra.mxu0 0.0
        %544 = vmatprep.mubr.f32.mxu0 0.0
        %545 = vmatmul.mubr.f32.gmra.mrb[0].mxu0 %v475
        %v546 = vpop.f32.mrb[0].mxu0
        %v547 = vadd.f32 %v472, %v546
        %v548 = vpop.f32.mrb[0].mxu0
        %549 = vmatprep.mubr.f32.mxu0 0.0
        %550 = vmatmul.mubr.f32.gmra.mrb[0].mxu0 %v478
        %v551 = vpop.f32.mrb[0].mxu0
        %v552 = vadd.f32 %v472, %v551
        %v553 = vpop.f32.mrb[0].mxu0
        %554 = vdwg.mxu0
        %v555 = vld [vmem:[%s6] sm:$0xff]
        %v556 = vld [vmem:[%s6 + $0x8] sm:$0xff]
        %v557 = vld [vmem:[%s6 + $0x10] sm:$0xff]
        %v558 = vld [vmem:[%s6 + $0x18] sm:$0xff]
        %v559 = vld [vmem:[%s7] sm:$0x1]
        %v561 = vlaneseq
        %v562 = vshrl.u32 %v561, 7
        %v563 = vsub.s32 0, %v562
        %v564 = vrot.slane %v559, %v563
        %566 = vmatprep.subr.mxu0 0.0
        %567 = vmatpush1.msra.mxu0 %v555
        %568 = vmatprep.subr.mxu0 0.0
        %569 = vmatpush1.msra.mxu0 %v556
        %570 = vmatprep.subr.mxu0 0.0
        %571 = vmatpush1.msra.mxu0 %v557
        %572 = vmatprep.subr.mxu0 0.0
        %573 = vmatpush1.msra.mxu0 %v558
        %574 = vmatprep.subr.mxu0 0.0
        %575 = vmatpush1.msra.mxu0 0.0
        %576 = vmatprep.subr.mxu0 0.0
        %577 = vmatpush1.msra.mxu0 0.0
        %578 = vmatprep.subr.mxu0 0.0
        %579 = vmatpush1.msra.mxu0 0.0
        %580 = vmatprep.subr.mxu0 0.0
        %581 = vmatpush1.msra.mxu0 0.0
        %582 = vmatprep.subr.mxu0 0.0
        %583 = vmatpush1.msra.mxu0 0.0
        %584 = vmatprep.subr.mxu0 0.0
        %585 = vmatpush1.msra.mxu0 0.0
        %586 = vmatprep.subr.mxu0 0.0
        %587 = vmatpush1.msra.mxu0 0.0
        %588 = vmatprep.subr.mxu0 0.0
        %589 = vmatpush1.msra.mxu0 0.0
        %590 = vmatprep.subr.mxu0 0.0
        %591 = vmatpush1.msra.mxu0 0.0
        %592 = vmatprep.subr.mxu0 0.0
        %593 = vmatpush1.msra.mxu0 0.0
        %594 = vmatprep.subr.mxu0 0.0
        %595 = vmatpush1.msra.mxu0 0.0
        %596 = vmatprep.subr.mxu0 0.0
        %597 = vmatpush1.msra.mxu0 0.0
        %598 = vmatprep.subr.mxu0 0.0
        %599 = vmatpush1.msra.mxu0 0.0
        %600 = vmatprep.subr.mxu0 0.0
        %601 = vmatpush1.msra.mxu0 0.0
        %602 = vmatprep.subr.mxu0 0.0
        %603 = vmatpush1.msra.mxu0 0.0
        %604 = vmatprep.subr.mxu0 0.0
        %605 = vmatpush1.msra.mxu0 0.0
        %606 = vmatprep.subr.mxu0 0.0
        %607 = vmatpush1.msra.mxu0 0.0
        %608 = vmatprep.subr.mxu0 0.0
        %609 = vmatpush1.msra.mxu0 0.0
        %610 = vmatprep.subr.mxu0 0.0
        %611 = vmatpush1.msra.mxu0 0.0
        %612 = vmatprep.subr.mxu0 0.0
        %613 = vmatpush1.msra.mxu0 0.0
        %614 = vmatprep.subr.mxu0 0.0
        %615 = vmatpush1.msra.mxu0 0.0
        %616 = vmatprep.subr.mxu0 0.0
        %617 = vmatpush1.msra.mxu0 0.0
        %618 = vmatprep.subr.mxu0 0.0
        %619 = vmatpush1.msra.mxu0 0.0
        %620 = vmatprep.subr.mxu0 0.0
        %621 = vmatpush1.msra.mxu0 0.0
        %622 = vmatprep.subr.mxu0 0.0
        %623 = vmatpush1.msra.mxu0 0.0
        %624 = vmatprep.subr.mxu0 0.0
        %625 = vmatpush1.msra.mxu0 0.0
        %626 = vmatprep.subr.mxu0 0.0
        %627 = vmatpush1.msra.mxu0 0.0
        %628 = vmatprep.subr.mxu0 0.0
        %629 = vmatpush1.msra.mxu0 0.0
        %630 = vmatprep.mubr.f32.mxu0 0.0
        %631 = vmatmul.mubr.f32.gmra.mrb[0].mxu0 %v475
        %v632 = vpop.f32.mrb[0].mxu0
        %v633 = vadd.f32 %v564, %v632
        %v634 = vpop.f32.mrb[0].mxu0
        %635 = vmatprep.mubr.f32.mxu0 0.0
        %636 = vmatmul.mubr.f32.gmra.mrb[0].mxu0 %v478
        %v637 = vpop.f32.mrb[0].mxu0
        %v638 = vadd.f32 %v564, %v637
        %v639 = vpop.f32.mrb[0].mxu0
        %640 = vdwg.mxu0
        %v641 = vld [vmem:[%s8] sm:$0xff]
        %v642 = vld [vmem:[%s8 + $0x8] sm:$0xff]
        %v643 = vld [vmem:[%s8 + $0x10] sm:$0xff]
        %v644 = vld [vmem:[%s8 + $0x18] sm:$0xff]
        %vm645 = vcmask 64512
        %v647 = vsel %vm645, %v460, 0
        %v650 = vsel %vm645, %v547, 0
        %v653 = vsel %vm645, %v552, 0
        %655 = vmatprep.subr.mxu0 0.0
        %656 = vmatpush1.xpose.msra.mxu0 %v650
        %657 = vmatprep.subr.mxu0 0.0
        %658 = vmatpush1.xpose.msra.mxu0 %v653
        %659 = vmatprep.subr.mxu0 0.0
        %660 = vmatpush1.xpose.msra.mxu0 0.0
        %661 = vmatprep.subr.mxu0 0.0
        %662 = vmatpush1.xpose.msra.mxu0 0.0
        %663 = vmatprep.subr.mxu0 0.0
        %664 = vmatpush1.xpose.msra.mxu0 0.0
        %665 = vmatprep.subr.mxu0 0.0
        %666 = vmatpush1.xpose.msra.mxu0 0.0
        %667 = vmatprep.subr.mxu0 0.0
        %668 = vmatpush1.xpose.msra.mxu0 0.0
        %669 = vmatprep.subr.mxu0 0.0
        %670 = vmatpush1.xpose.msra.mxu0 0.0
        %671 = vmatprep.subr.mxu0 0.0
        %672 = vmatpush1.xpose.msra.mxu0 0.0
        %673 = vmatprep.subr.mxu0 0.0
        %674 = vmatpush1.xpose.msra.mxu0 0.0
        %675 = vmatprep.subr.mxu0 0.0
        %676 = vmatpush1.xpose.msra.mxu0 0.0
        %677 = vmatprep.subr.mxu0 0.0
        %678 = vmatpush1.xpose.msra.mxu0 0.0
        %679 = vmatprep.subr.mxu0 0.0
        %680 = vmatpush1.xpose.msra.mxu0 0.0
        %681 = vmatprep.subr.mxu0 0.0
        %682 = vmatpush1.xpose.msra.mxu0 0.0
        %683 = vmatprep.subr.mxu0 0.0
        %684 = vmatpush1.xpose.msra.mxu0 0.0
        %685 = vmatprep.subr.mxu0 0.0
        %686 = vmatpush1.xpose.msra.mxu0 0.0
        %687 = vmatprep.subr.mxu0 0.0
        %688 = vmatpush1.xpose.msra.mxu0 0.0
        %689 = vmatprep.subr.mxu0 0.0
        %690 = vmatpush1.xpose.msra.mxu0 0.0
        %691 = vmatprep.subr.mxu0 0.0
        %692 = vmatpush1.xpose.msra.mxu0 0.0
        %693 = vmatprep.subr.mxu0 0.0
        %694 = vmatpush1.xpose.msra.mxu0 0.0
        %695 = vmatprep.subr.mxu0 0.0
        %696 = vmatpush1.xpose.msra.mxu0 0.0
        %697 = vmatprep.subr.mxu0 0.0
        %698 = vmatpush1.xpose.msra.mxu0 0.0
        %699 = vmatprep.subr.mxu0 0.0
        %700 = vmatpush1.xpose.msra.mxu0 0.0
        %701 = vmatprep.subr.mxu0 0.0
        %702 = vmatpush1.xpose.msra.mxu0 0.0
        %703 = vmatprep.subr.mxu0 0.0
        %704 = vmatpush1.xpose.msra.mxu0 0.0
        %705 = vmatprep.subr.mxu0 0.0
        %706 = vmatpush1.xpose.msra.mxu0 0.0
        %707 = vmatprep.subr.mxu0 0.0
        %708 = vmatpush1.xpose.msra.mxu0 0.0
        %709 = vmatprep.subr.mxu0 0.0
        %710 = vmatpush1.xpose.msra.mxu0 0.0
        %711 = vmatprep.subr.mxu0 0.0
        %712 = vmatpush1.xpose.msra.mxu0 0.0
        %713 = vmatprep.subr.mxu0 0.0
        %714 = vmatpush1.xpose.msra.mxu0 0.0
        %715 = vmatprep.subr.mxu0 0.0
        %716 = vmatpush1.xpose.msra.mxu0 0.0
        %717 = vmatprep.subr.mxu0 0.0
        %718 = vmatpush1.xpose.msra.mxu0 0.0
        %719 = vmatprep.mubr.f32.mxu0 0.0
        %720 = vmatmul.mubr.f32.gmra.mrb[0].mxu0 %v647
        %v721 = vpop.f32.mrb[0].mxu0
        %v722 = vadd.f32 0.0, %v721
        %v723 = vpop.f32.mrb[0].mxu0
        %724 = vdwg.mxu0
        %vm725 = vcmask 130048
        %v726 = vsel %vm725, %v722, -inf
        %727 = vmax.xlane.f32.xlu0 %v726
        %v728 = vpop.xlane.xlu0 %727
        %v729 = vsub.f32 %v722, %v728
        %v730 = vmul.f32 %v729, 1.442695
        %v731 = vpow.pop %v730
        %v732 = vsel %vm725, %v731, 0.0
        %733 = vadd.xlane.f32.xlu0 %v732
        %v734 = vpop.xlane.xlu0 %733
        %v735 = vrcp.pop %v734
        %v736 = vmul.f32 %v731, %v735
        %v738 = vsel %vm725, %v736, 0
        %740 = vmatprep.subr.mxu0 0.0
        %741 = vmatpush1.msra.mxu0 %v633
        %742 = vmatprep.subr.mxu0 0.0
        %743 = vmatpush1.msra.mxu0 %v638
        %744 = vmatprep.subr.mxu0 0.0
        %745 = vmatpush1.msra.mxu0 0.0
        %746 = vmatprep.subr.mxu0 0.0
        %747 = vmatpush1.msra.mxu0 0.0
        %748 = vmatprep.subr.mxu0 0.0
        %749 = vmatpush1.msra.mxu0 0.0
        %750 = vmatprep.subr.mxu0 0.0
        %751 = vmatpush1.msra.mxu0 0.0
        %752 = vmatprep.subr.mxu0 0.0
        %753 = vmatpush1.msra.mxu0 0.0
        %754 = vmatprep.subr.mxu0 0.0
        %755 = vmatpush1.msra.mxu0 0.0
        %756 = vmatprep.subr.mxu0 0.0
        %757 = vmatpush1.msra.mxu0 0.0
        %758 = vmatprep.subr.mxu0 0.0
        %759 = vmatpush1.msra.mxu0 0.0
        %760 = vmatprep.subr.mxu0 0.0
        %761 = vmatpush1.msra.mxu0 0.0
        %762 = vmatprep.subr.mxu0 0.0
        %763 = vmatpush1.msra.mxu0 0.0
        %764 = vmatprep.subr.mxu0 0.0
        %765 = vmatpush1.msra.mxu0 0.0
        %766 = vmatprep.subr.mxu0 0.0
        %767 = vmatpush1.msra.mxu0 0.0
        %768 = vmatprep.subr.mxu0 0.0
        %769 = vmatpush1.msra.mxu0 0.0
        %770 = vmatprep.subr.mxu0 0.0
        %771 = vmatpush1.msra.mxu0 0.0
        %772 = vmatprep.subr.mxu0 0.0
        %773 = vmatpush1.msra.mxu0 0.0
        %774 = vmatprep.subr.mxu0 0.0
        %775 = vmatpush1.msra.mxu0 0.0
        %776 = vmatprep.subr.mxu0 0.0
        %777 = vmatpush1.msra.mxu0 0.0
        %778 = vmatprep.subr.mxu0 0.0
        %779 = vmatpush1.msra.mxu0 0.0
        %780 = vmatprep.subr.mxu0 0.0
        %781 = vmatpush1.msra.mxu0 0.0
        %782 = vmatprep.subr.mxu0 0.0
        %783 = vmatpush1.msra.mxu0 0.0
        %784 = vmatprep.subr.mxu0 0.0
        %785 = vmatpush1.msra.mxu0 0.0
        %786 = vmatprep.subr.mxu0 0.0
        %787 = vmatpush1.msra.mxu0 0.0
        %788 = vmatprep.subr.mxu0 0.0
        %789 = vmatpush1.msra.mxu0 0.0
        %790 = vmatprep.subr.mxu0 0.0
        %791 = vmatpush1.msra.mxu0 0.0
        %792 = vmatprep.subr.mxu0 0.0
        %793 = vmatpush1.msra.mxu0 0.0
        %794 = vmatprep.subr.mxu0 0.0
        %795 = vmatpush1.msra.mxu0 0.0
        %796 = vmatprep.subr.mxu0 0.0
        %797 = vmatpush1.msra.mxu0 0.0
        %798 = vmatprep.subr.mxu0 0.0
        %799 = vmatpush1.msra.mxu0 0.0
        %800 = vmatprep.subr.mxu0 0.0
        %801 = vmatpush1.msra.mxu0 0.0
        %802 = vmatprep.subr.mxu0 0.0
        %803 = vmatpush1.msra.mxu0 0.0
        %804 = vmatprep.mubr.f32.mxu0 0.0
        %805 = vmatmul.mubr.f32.gmra.mrb[0].mxu0 %v738
        %v806 = vpop.f32.mrb[0].mxu0
        %v807 = vadd.f32 0.0, %v806
        %v808 = vpop.f32.mrb[0].mxu0
        %809 = vdwg.mxu0
        %810 = vrot.lane.b32.xlu0 %v460, 120
        %v811 = vpop.permute.xlu0 %810
        %812 = vrot.lane.b32.xlu0 %v547, 120
        %v813 = vpop.permute.xlu0 %812
        %814 = vrot.lane.b32.xlu0 %v552, 120
        %v815 = vpop.permute.xlu0 %814
        %v816 = vsel %vm645, %v811, 0
        %v818 = vsel %vm645, %v813, 0
        %v820 = vsel %vm645, %v815, 0
        %822 = vmatprep.subr.mxu0 0.0
        %823 = vmatpush1.xpose.msra.mxu0 %v818
        %824 = vmatprep.subr.mxu0 0.0
        %825 = vmatpush1.xpose.msra.mxu0 %v820
        %826 = vmatprep.subr.mxu0 0.0
        %827 = vmatpush1.xpose.msra.mxu0 0.0
        %828 = vmatprep.subr.mxu0 0.0
        %829 = vmatpush1.xpose.msra.mxu0 0.0
        %830 = vmatprep.subr.mxu0 0.0
        %831 = vmatpush1.xpose.msra.mxu0 0.0
        %832 = vmatprep.subr.mxu0 0.0
        %833 = vmatpush1.xpose.msra.mxu0 0.0
        %834 = vmatprep.subr.mxu0 0.0
        %835 = vmatpush1.xpose.msra.mxu0 0.0
        %836 = vmatprep.subr.mxu0 0.0
        %837 = vmatpush1.xpose.msra.mxu0 0.0
        %838 = vmatprep.subr.mxu0 0.0
        %839 = vmatpush1.xpose.msra.mxu0 0.0
        %840 = vmatprep.subr.mxu0 0.0
        %841 = vmatpush1.xpose.msra.mxu0 0.0
        %842 = vmatprep.subr.mxu0 0.0
        %843 = vmatpush1.xpose.msra.mxu0 0.0
        %844 = vmatprep.subr.mxu0 0.0
        %845 = vmatpush1.xpose.msra.mxu0 0.0
        %846 = vmatprep.subr.mxu0 0.0
        %847 = vmatpush1.xpose.msra.mxu0 0.0
        %848 = vmatprep.subr.mxu0 0.0
        %849 = vmatpush1.xpose.msra.mxu0 0.0
        %850 = vmatprep.subr.mxu0 0.0
        %851 = vmatpush1.xpose.msra.mxu0 0.0
        %852 = vmatprep.subr.mxu0 0.0
        %853 = vmatpush1.xpose.msra.mxu0 0.0
        %854 = vmatprep.subr.mxu0 0.0
        %855 = vmatpush1.xpose.msra.mxu0 0.0
        %856 = vmatprep.subr.mxu0 0.0
        %857 = vmatpush1.xpose.msra.mxu0 0.0
        %858 = vmatprep.subr.mxu0 0.0
        %859 = vmatpush1.xpose.msra.mxu0 0.0
        %860 = vmatprep.subr.mxu0 0.0
        %861 = vmatpush1.xpose.msra.mxu0 0.0
        %862 = vmatprep.subr.mxu0 0.0
        %863 = vmatpush1.xpose.msra.mxu0 0.0
        %864 = vmatprep.subr.mxu0 0.0
        %865 = vmatpush1.xpose.msra.mxu0 0.0
        %866 = vmatprep.subr.mxu0 0.0
        %867 = vmatpush1.xpose.msra.mxu0 0.0
        %868 = vmatprep.subr.mxu0 0.0
        %869 = vmatpush1.xpose.msra.mxu0 0.0
        %870 = vmatprep.subr.mxu0 0.0
        %871 = vmatpush1.xpose.msra.mxu0 0.0
        %872 = vmatprep.subr.mxu0 0.0
        %873 = vmatpush1.xpose.msra.mxu0 0.0
        %874 = vmatprep.subr.mxu0 0.0
        %875 = vmatpush1.xpose.msra.mxu0 0.0
        %876 = vmatprep.subr.mxu0 0.0
        %877 = vmatpush1.xpose.msra.mxu0 0.0
        %878 = vmatprep.subr.mxu0 0.0
        %879 = vmatpush1.xpose.msra.mxu0 0.0
        %880 = vmatprep.subr.mxu0 0.0
        %881 = vmatpush1.xpose.msra.mxu0 0.0
        %882 = vmatprep.subr.mxu0 0.0
        %883 = vmatpush1.xpose.msra.mxu0 0.0
        %884 = vmatprep.subr.mxu0 0.0
        %885 = vmatpush1.xpose.msra.mxu0 0.0
        %886 = vmatprep.mubr.f32.mxu0 0.0
        %887 = vmatmul.mubr.f32.gmra.mrb[0].mxu0 %v816
        %v888 = vpop.f32.mrb[0].mxu0
        %v889 = vadd.f32 0.0, %v888
        %v890 = vpop.f32.mrb[0].mxu0
        %891 = vdwg.mxu0
        %v892 = vsel %vm725, %v889, -inf
        %893 = vmax.xlane.f32.xlu0 %v892
        %v894 = vpop.xlane.xlu0 %893
        %v895 = vsub.f32 %v889, %v894
        %v896 = vmul.f32 %v895, 1.442695
        %v897 = vpow.pop %v896
        %v898 = vsel %vm725, %v897, 0.0
        %899 = vadd.xlane.f32.xlu0 %v898
        %v900 = vpop.xlane.xlu0 %899
        %v901 = vrcp.pop %v900
        %v902 = vmul.f32 %v897, %v901
        %905 = vrot.lane.b32.xlu0 %v633, 120
        %v906 = vpop.permute.xlu0 %905
        %907 = vrot.lane.b32.xlu0 %v638, 120
        %v908 = vpop.permute.xlu0 %907
        %v912 = vsel %vm725, %v902, 0
        %914 = vmatprep.subr.mxu0 0.0
        %915 = vmatpush1.msra.mxu0 %v906
        %916 = vmatprep.subr.mxu0 0.0
        %917 = vmatpush1.msra.mxu0 %v908
        %918 = vmatprep.subr.mxu0 0.0
        %919 = vmatpush1.msra.mxu0 0.0
        %920 = vmatprep.subr.mxu0 0.0
        %921 = vmatpush1.msra.mxu0 0.0
        %922 = vmatprep.subr.mxu0 0.0
        %923 = vmatpush1.msra.mxu0 0.0
        %924 = vmatprep.subr.mxu0 0.0
        %925 = vmatpush1.msra.mxu0 0.0
        %926 = vmatprep.subr.mxu0 0.0
        %927 = vmatpush1.msra.mxu0 0.0
        %928 = vmatprep.subr.mxu0 0.0
        %929 = vmatpush1.msra.mxu0 0.0
        %930 = vmatprep.subr.mxu0 0.0
        %931 = vmatpush1.msra.mxu0 0.0
        %932 = vmatprep.subr.mxu0 0.0
        %933 = vmatpush1.msra.mxu0 0.0
        %934 = vmatprep.subr.mxu0 0.0
        %935 = vmatpush1.msra.mxu0 0.0
        %936 = vmatprep.subr.mxu0 0.0
        %937 = vmatpush1.msra.mxu0 0.0
        %938 = vmatprep.subr.mxu0 0.0
        %939 = vmatpush1.msra.mxu0 0.0
        %940 = vmatprep.subr.mxu0 0.0
        %941 = vmatpush1.msra.mxu0 0.0
        %942 = vmatprep.subr.mxu0 0.0
        %943 = vmatpush1.msra.mxu0 0.0
        %944 = vmatprep.subr.mxu0 0.0
        %945 = vmatpush1.msra.mxu0 0.0
        %946 = vmatprep.subr.mxu0 0.0
        %947 = vmatpush1.msra.mxu0 0.0
        %948 = vmatprep.subr.mxu0 0.0
        %949 = vmatpush1.msra.mxu0 0.0
        %950 = vmatprep.subr.mxu0 0.0
        %951 = vmatpush1.msra.mxu0 0.0
        %952 = vmatprep.subr.mxu0 0.0
        %953 = vmatpush1.msra.mxu0 0.0
        %954 = vmatprep.subr.mxu0 0.0
        %955 = vmatpush1.msra.mxu0 0.0
        %956 = vmatprep.subr.mxu0 0.0
        %957 = vmatpush1.msra.mxu0 0.0
        %958 = vmatprep.subr.mxu0 0.0
        %959 = vmatpush1.msra.mxu0 0.0
        %960 = vmatprep.subr.mxu0 0.0
        %961 = vmatpush1.msra.mxu0 0.0
        %962 = vmatprep.subr.mxu0 0.0
        %963 = vmatpush1.msra.mxu0 0.0
        %964 = vmatprep.subr.mxu0 0.0
        %965 = vmatpush1.msra.mxu0 0.0
        %966 = vmatprep.subr.mxu0 0.0
        %967 = vmatpush1.msra.mxu0 0.0
        %968 = vmatprep.subr.mxu0 0.0
        %969 = vmatpush1.msra.mxu0 0.0
        %970 = vmatprep.subr.mxu0 0.0
        %971 = vmatpush1.msra.mxu0 0.0
        %972 = vmatprep.subr.mxu0 0.0
        %973 = vmatpush1.msra.mxu0 0.0
        %974 = vmatprep.subr.mxu0 0.0
        %975 = vmatpush1.msra.mxu0 0.0
        %976 = vmatprep.subr.mxu0 0.0
        %977 = vmatpush1.msra.mxu0 0.0
        %978 = vmatprep.mubr.f32.mxu0 0.0
        %979 = vmatmul.mubr.f32.gmra.mrb[0].mxu0 %v912
        %v980 = vpop.f32.mrb[0].mxu0
        %v981 = vadd.f32 0.0, %v980
        %v982 = vpop.f32.mrb[0].mxu0
        %983 = vdwg.mxu0
        %v985 = vsel %vm645, %v981, 0
        %987 = vmatprep.subr.mxu0 0.0
        %988 = vmatpush1.msra.mxu0 %v642
        %989 = vmatprep.subr.mxu0 0.0
        %990 = vmatpush1.msra.mxu0 0.0
        %991 = vmatprep.subr.mxu0 0.0
        %992 = vmatpush1.msra.mxu0 0.0
        %993 = vmatprep.subr.mxu0 0.0
        %994 = vmatpush1.msra.mxu0 0.0
        %995 = vmatprep.subr.mxu0 0.0
        %996 = vmatpush1.msra.mxu0 0.0
        %997 = vmatprep.subr.mxu0 0.0
        %998 = vmatpush1.msra.mxu0 0.0
        %999 = vmatprep.subr.mxu0 0.0
        %1000 = vmatpush1.msra.mxu0 0.0
        %1001 = vmatprep.subr.mxu0 0.0
        %1002 = vmatpush1.msra.mxu0 0.0
        %1003 = vmatprep.subr.mxu0 0.0
        %1004 = vmatpush1.msra.mxu0 0.0
        %1005 = vmatprep.subr.mxu0 0.0
        %1006 = vmatpush1.msra.mxu0 0.0
        %1007 = vmatprep.subr.mxu0 0.0
        %1008 = vmatpush1.msra.mxu0 0.0
        %1009 = vmatprep.subr.mxu0 0.0
        %1010 = vmatpush1.msra.mxu0 0.0
        %1011 = vmatprep.subr.mxu0 0.0
        %1012 = vmatpush1.msra.mxu0 0.0
        %1013 = vmatprep.subr.mxu0 0.0
        %1014 = vmatpush1.msra.mxu0 0.0
        %1015 = vmatprep.subr.mxu0 0.0
        %1016 = vmatpush1.msra.mxu0 0.0
        %1017 = vmatprep.subr.mxu0 0.0
        %1018 = vmatpush1.msra.mxu0 0.0
        %1019 = vmatprep.subr.mxu0 0.0
        %1020 = vmatpush1.msra.mxu0 0.0
        %1021 = vmatprep.subr.mxu0 0.0
        %1022 = vmatpush1.msra.mxu0 0.0
        %1023 = vmatprep.subr.mxu0 0.0
        %1024 = vmatpush1.msra.mxu0 0.0
        %1025 = vmatprep.subr.mxu0 0.0
        %1026 = vmatpush1.msra.mxu0 0.0
        %1027 = vmatprep.subr.mxu0 0.0
        %1028 = vmatpush1.msra.mxu0 0.0
        %1029 = vmatprep.subr.mxu0 0.0
        %1030 = vmatpush1.msra.mxu0 0.0
        %1031 = vmatprep.subr.mxu0 0.0
        %1032 = vmatpush1.msra.mxu0 0.0
        %1033 = vmatprep.subr.mxu0 0.0
        %1034 = vmatpush1.msra.mxu0 0.0
        %1035 = vmatprep.subr.mxu0 0.0
        %1036 = vmatpush1.msra.mxu0 0.0
        %1037 = vmatprep.subr.mxu0 0.0
        %1038 = vmatpush1.msra.mxu0 0.0
        %1039 = vmatprep.subr.mxu0 0.0
        %1040 = vmatpush1.msra.mxu0 0.0
        %1041 = vmatprep.subr.mxu0 0.0
        %1042 = vmatpush1.msra.mxu0 0.0
        %1043 = vmatprep.subr.mxu0 0.0
        %1044 = vmatpush1.msra.mxu0 0.0
        %1045 = vmatprep.subr.mxu0 0.0
        %1046 = vmatpush1.msra.mxu0 0.0
        %1047 = vmatprep.subr.mxu0 0.0
        %1048 = vmatpush1.msra.mxu0 0.0
        %1049 = vmatprep.subr.mxu0 0.0
        %1050 = vmatpush1.msra.mxu0 0.0
        %1051 = vmatprep.mubr.f32.mxu0 0.0
        %1052 = vmatmul.mubr.f32.gmra.mrb[0].mxu0 %v985
        %v1053 = vpop.f32.mrb[0].mxu0
        %v1054 = vadd.f32 0.0, %v1053
        %v1055 = vpop.f32.mrb[0].mxu0
        %1056 = vdwg.mxu0
        %v1058 = vsel %vm645, %v807, 0
        %1060 = vmatprep.subr.mxu0 0.0
        %1061 = vmatpush1.msra.mxu0 %v641
        %1062 = vmatprep.subr.mxu0 0.0
        %1063 = vmatpush1.msra.mxu0 0.0
        %1064 = vmatprep.subr.mxu0 0.0
        %1065 = vmatpush1.msra.mxu0 0.0
        %1066 = vmatprep.subr.mxu0 0.0
        %1067 = vmatpush1.msra.mxu0 0.0
        %1068 = vmatprep.subr.mxu0 0.0
        %1069 = vmatpush1.msra.mxu0 0.0
        %1070 = vmatprep.subr.mxu0 0.0
        %1071 = vmatpush1.msra.mxu0 0.0
        %1072 = vmatprep.subr.mxu0 0.0
        %1073 = vmatpush1.msra.mxu0 0.0
        %1074 = vmatprep.subr.mxu0 0.0
        %1075 = vmatpush1.msra.mxu0 0.0
        %1076 = vmatprep.subr.mxu0 0.0
        %1077 = vmatpush1.msra.mxu0 0.0
        %1078 = vmatprep.subr.mxu0 0.0
        %1079 = vmatpush1.msra.mxu0 0.0
        %1080 = vmatprep.subr.mxu0 0.0
        %1081 = vmatpush1.msra.mxu0 0.0
        %1082 = vmatprep.subr.mxu0 0.0
        %1083 = vmatpush1.msra.mxu0 0.0
        %1084 = vmatprep.subr.mxu0 0.0
        %1085 = vmatpush1.msra.mxu0 0.0
        %1086 = vmatprep.subr.mxu0 0.0
        %1087 = vmatpush1.msra.mxu0 0.0
        %1088 = vmatprep.subr.mxu0 0.0
        %1089 = vmatpush1.msra.mxu0 0.0
        %1090 = vmatprep.subr.mxu0 0.0
        %1091 = vmatpush1.msra.mxu0 0.0
        %1092 = vmatprep.subr.mxu0 0.0
        %1093 = vmatpush1.msra.mxu0 0.0
        %1094 = vmatprep.subr.mxu0 0.0
        %1095 = vmatpush1.msra.mxu0 0.0
        %1096 = vmatprep.subr.mxu0 0.0
        %1097 = vmatpush1.msra.mxu0 0.0
        %1098 = vmatprep.subr.mxu0 0.0
        %1099 = vmatpush1.msra.mxu0 0.0
        %1100 = vmatprep.subr.mxu0 0.0
        %1101 = vmatpush1.msra.mxu0 0.0
        %1102 = vmatprep.subr.mxu0 0.0
        %1103 = vmatpush1.msra.mxu0 0.0
        %1104 = vmatprep.subr.mxu0 0.0
        %1105 = vmatpush1.msra.mxu0 0.0
        %1106 = vmatprep.subr.mxu0 0.0
        %1107 = vmatpush1.msra.mxu0 0.0
        %1108 = vmatprep.subr.mxu0 0.0
        %1109 = vmatpush1.msra.mxu0 0.0
        %1110 = vmatprep.subr.mxu0 0.0
        %1111 = vmatpush1.msra.mxu0 0.0
        %1112 = vmatprep.subr.mxu0 0.0
        %1113 = vmatpush1.msra.mxu0 0.0
        %1114 = vmatprep.subr.mxu0 0.0
        %1115 = vmatpush1.msra.mxu0 0.0
        %1116 = vmatprep.subr.mxu0 0.0
        %1117 = vmatpush1.msra.mxu0 0.0
        %1118 = vmatprep.subr.mxu0 0.0
        %1119 = vmatpush1.msra.mxu0 0.0
        %1120 = vmatprep.subr.mxu0 0.0
        %1121 = vmatpush1.msra.mxu0 0.0
        %1122 = vmatprep.subr.mxu0 0.0
        %1123 = vmatpush1.msra.mxu0 0.0
        %1124 = vmatprep.mubr.f32.mxu0 0.0
        %1125 = vmatmul.mubr.f32.gmra.mrb[0].mxu0 %v1058
        %v1126 = vpop.f32.mrb[0].mxu0
        %v1127 = vadd.f32 %v1054, %v1126
        %v1128 = vpop.f32.mrb[0].mxu0
        %1129 = vdwg.mxu0
        %1130 = vrot.lane.b32.xlu0 %v460, 112
        %v1131 = vpop.permute.xlu0 %1130
        %1132 = vrot.lane.b32.xlu0 %v547, 112
        %v1133 = vpop.permute.xlu0 %1132
        %1134 = vrot.lane.b32.xlu0 %v552, 112
        %v1135 = vpop.permute.xlu0 %1134
        %v1136 = vsel %vm645, %v1131, 0
        %v1138 = vsel %vm645, %v1133, 0
        %v1140 = vsel %vm645, %v1135, 0
        %1142 = vmatprep.subr.mxu0 0.0
        %1143 = vmatpush1.xpose.msra.mxu0 %v1138
        %1144 = vmatprep.subr.mxu0 0.0
        %1145 = vmatpush1.xpose.msra.mxu0 %v1140
        %1146 = vmatprep.subr.mxu0 0.0
        %1147 = vmatpush1.xpose.msra.mxu0 0.0
        %1148 = vmatprep.subr.mxu0 0.0
        %1149 = vmatpush1.xpose.msra.mxu0 0.0
        %1150 = vmatprep.subr.mxu0 0.0
        %1151 = vmatpush1.xpose.msra.mxu0 0.0
        %1152 = vmatprep.subr.mxu0 0.0
        %1153 = vmatpush1.xpose.msra.mxu0 0.0
        %1154 = vmatprep.subr.mxu0 0.0
        %1155 = vmatpush1.xpose.msra.mxu0 0.0
        %1156 = vmatprep.subr.mxu0 0.0
        %1157 = vmatpush1.xpose.msra.mxu0 0.0
        %1158 = vmatprep.subr.mxu0 0.0
        %1159 = vmatpush1.xpose.msra.mxu0 0.0
        %1160 = vmatprep.subr.mxu0 0.0
        %1161 = vmatpush1.xpose.msra.mxu0 0.0
        %1162 = vmatprep.subr.mxu0 0.0
        %1163 = vmatpush1.xpose.msra.mxu0 0.0
        %1164 = vmatprep.subr.mxu0 0.0
        %1165 = vmatpush1.xpose.msra.mxu0 0.0
        %1166 = vmatprep.subr.mxu0 0.0
        %1167 = vmatpush1.xpose.msra.mxu0 0.0
        %1168 = vmatprep.subr.mxu0 0.0
        %1169 = vmatpush1.xpose.msra.mxu0 0.0
        %1170 = vmatprep.subr.mxu0 0.0
        %1171 = vmatpush1.xpose.msra.mxu0 0.0
        %1172 = vmatprep.subr.mxu0 0.0
        %1173 = vmatpush1.xpose.msra.mxu0 0.0
        %1174 = vmatprep.subr.mxu0 0.0
        %1175 = vmatpush1.xpose.msra.mxu0 0.0
        %1176 = vmatprep.subr.mxu0 0.0
        %1177 = vmatpush1.xpose.msra.mxu0 0.0
        %1178 = vmatprep.subr.mxu0 0.0
        %1179 = vmatpush1.xpose.msra.mxu0 0.0
        %1180 = vmatprep.subr.mxu0 0.0
        %1181 = vmatpush1.xpose.msra.mxu0 0.0
        %1182 = vmatprep.subr.mxu0 0.0
        %1183 = vmatpush1.xpose.msra.mxu0 0.0
        %1184 = vmatprep.subr.mxu0 0.0
        %1185 = vmatpush1.xpose.msra.mxu0 0.0
        %1186 = vmatprep.subr.mxu0 0.0
        %1187 = vmatpush1.xpose.msra.mxu0 0.0
        %1188 = vmatprep.subr.mxu0 0.0
        %1189 = vmatpush1.xpose.msra.mxu0 0.0
        %1190 = vmatprep.subr.mxu0 0.0
        %1191 = vmatpush1.xpose.msra.mxu0 0.0
        %1192 = vmatprep.subr.mxu0 0.0
        %1193 = vmatpush1.xpose.msra.mxu0 0.0
        %1194 = vmatprep.subr.mxu0 0.0
        %1195 = vmatpush1.xpose.msra.mxu0 0.0
        %1196 = vmatprep.subr.mxu0 0.0
        %1197 = vmatpush1.xpose.msra.mxu0 0.0
        %1198 = vmatprep.subr.mxu0 0.0
        %1199 = vmatpush1.xpose.msra.mxu0 0.0
        %1200 = vmatprep.subr.mxu0 0.0
        %1201 = vmatpush1.xpose.msra.mxu0 0.0
        %1202 = vmatprep.subr.mxu0 0.0
        %1203 = vmatpush1.xpose.msra.mxu0 0.0
        %1204 = vmatprep.subr.mxu0 0.0
        %1205 = vmatpush1.xpose.msra.mxu0 0.0
        %1206 = vmatprep.mubr.f32.mxu0 0.0
        %1207 = vmatmul.mubr.f32.gmra.mrb[0].mxu0 %v1136
        %v1208 = vpop.f32.mrb[0].mxu0
        %v1209 = vadd.f32 0.0, %v1208
        %v1210 = vpop.f32.mrb[0].mxu0
        %1211 = vdwg.mxu0
        %v1212 = vsel %vm725, %v1209, -inf
        %1213 = vmax.xlane.f32.xlu0 %v1212
        %v1214 = vpop.xlane.xlu0 %1213
        %v1215 = vsub.f32 %v1209, %v1214
        %v1216 = vmul.f32 %v1215, 1.442695
        %v1217 = vpow.pop %v1216
        %v1218 = vsel %vm725, %v1217, 0.0
        %1219 = vadd.xlane.f32.xlu0 %v1218
        %v1220 = vpop.xlane.xlu0 %1219
        %v1221 = vrcp.pop %v1220
        %v1222 = vmul.f32 %v1217, %v1221
        %1223 = vrot.lane.b32.xlu0 %v633, 112
        %v1224 = vpop.permute.xlu0 %1223
        %1225 = vrot.lane.b32.xlu0 %v638, 112
        %v1226 = vpop.permute.xlu0 %1225
        %v1230 = vsel %vm725, %v1222, 0
        %1232 = vmatprep.subr.mxu0 0.0
        %1233 = vmatpush1.msra.mxu0 %v1224
        %1234 = vmatprep.subr.mxu0 0.0
        %1235 = vmatpush1.msra.mxu0 %v1226
        %1236 = vmatprep.subr.mxu0 0.0
        %1237 = vmatpush1.msra.mxu0 0.0
        %1238 = vmatprep.subr.mxu0 0.0
        %1239 = vmatpush1.msra.mxu0 0.0
        %1240 = vmatprep.subr.mxu0 0.0
        %1241 = vmatpush1.msra.mxu0 0.0
        %1242 = vmatprep.subr.mxu0 0.0
        %1243 = vmatpush1.msra.mxu0 0.0
        %1244 = vmatprep.subr.mxu0 0.0
        %1245 = vmatpush1.msra.mxu0 0.0
        %1246 = vmatprep.subr.mxu0 0.0
        %1247 = vmatpush1.msra.mxu0 0.0
        %1248 = vmatprep.subr.mxu0 0.0
        %1249 = vmatpush1.msra.mxu0 0.0
        %1250 = vmatprep.subr.mxu0 0.0
        %1251 = vmatpush1.msra.mxu0 0.0
        %1252 = vmatprep.subr.mxu0 0.0
        %1253 = vmatpush1.msra.mxu0 0.0
        %1254 = vmatprep.subr.mxu0 0.0
        %1255 = vmatpush1.msra.mxu0 0.0
        %1256 = vmatprep.subr.mxu0 0.0
        %1257 = vmatpush1.msra.mxu0 0.0
        %1258 = vmatprep.subr.mxu0 0.0
        %1259 = vmatpush1.msra.mxu0 0.0
        %1260 = vmatprep.subr.mxu0 0.0
        %1261 = vmatpush1.msra.mxu0 0.0
        %1262 = vmatprep.subr.mxu0 0.0
        %1263 = vmatpush1.msra.mxu0 0.0
        %1264 = vmatprep.subr.mxu0 0.0
        %1265 = vmatpush1.msra.mxu0 0.0
        %1266 = vmatprep.subr.mxu0 0.0
        %1267 = vmatpush1.msra.mxu0 0.0
        %1268 = vmatprep.subr.mxu0 0.0
        %1269 = vmatpush1.msra.mxu0 0.0
        %1270 = vmatprep.subr.mxu0 0.0
        %1271 = vmatpush1.msra.mxu0 0.0
        %1272 = vmatprep.subr.mxu0 0.0
        %1273 = vmatpush1.msra.mxu0 0.0
        %1274 = vmatprep.subr.mxu0 0.0
        %1275 = vmatpush1.msra.mxu0 0.0
        %1276 = vmatprep.subr.mxu0 0.0
        %1277 = vmatpush1.msra.mxu0 0.0
        %1278 = vmatprep.subr.mxu0 0.0
        %1279 = vmatpush1.msra.mxu0 0.0
        %1280 = vmatprep.subr.mxu0 0.0
        %1281 = vmatpush1.msra.mxu0 0.0
        %1282 = vmatprep.subr.mxu0 0.0
        %1283 = vmatpush1.msra.mxu0 0.0
        %1284 = vmatprep.subr.mxu0 0.0
        %1285 = vmatpush1.msra.mxu0 0.0
        %1286 = vmatprep.subr.mxu0 0.0
        %1287 = vmatpush1.msra.mxu0 0.0
        %1288 = vmatprep.subr.mxu0 0.0
        %1289 = vmatpush1.msra.mxu0 0.0
        %1290 = vmatprep.subr.mxu0 0.0
        %1291 = vmatpush1.msra.mxu0 0.0
        %1292 = vmatprep.subr.mxu0 0.0
        %1293 = vmatpush1.msra.mxu0 0.0
        %1294 = vmatprep.subr.mxu0 0.0
        %1295 = vmatpush1.msra.mxu0 0.0
        %1296 = vmatprep.mubr.f32.mxu0 0.0
        %1297 = vmatmul.mubr.f32.gmra.mrb[0].mxu0 %v1230
        %v1298 = vpop.f32.mrb[0].mxu0
        %v1299 = vadd.f32 0.0, %v1298
        %v1300 = vpop.f32.mrb[0].mxu0
        %1301 = vdwg.mxu0
        %v1303 = vsel %vm645, %v1299, 0
        %1305 = vmatprep.subr.mxu0 0.0
        %1306 = vmatpush1.msra.mxu0 %v643
        %1307 = vmatprep.subr.mxu0 0.0
        %1308 = vmatpush1.msra.mxu0 0.0
        %1309 = vmatprep.subr.mxu0 0.0
        %1310 = vmatpush1.msra.mxu0 0.0
        %1311 = vmatprep.subr.mxu0 0.0
        %1312 = vmatpush1.msra.mxu0 0.0
        %1313 = vmatprep.subr.mxu0 0.0
        %1314 = vmatpush1.msra.mxu0 0.0
        %1315 = vmatprep.subr.mxu0 0.0
        %1316 = vmatpush1.msra.mxu0 0.0
        %1317 = vmatprep.subr.mxu0 0.0
        %1318 = vmatpush1.msra.mxu0 0.0
        %1319 = vmatprep.subr.mxu0 0.0
        %1320 = vmatpush1.msra.mxu0 0.0
        %1321 = vmatprep.subr.mxu0 0.0
        %1322 = vmatpush1.msra.mxu0 0.0
        %1323 = vmatprep.subr.mxu0 0.0
        %1324 = vmatpush1.msra.mxu0 0.0
        %1325 = vmatprep.subr.mxu0 0.0
        %1326 = vmatpush1.msra.mxu0 0.0
        %1327 = vmatprep.subr.mxu0 0.0
        %1328 = vmatpush1.msra.mxu0 0.0
        %1329 = vmatprep.subr.mxu0 0.0
        %1330 = vmatpush1.msra.mxu0 0.0
        %1331 = vmatprep.subr.mxu0 0.0
        %1332 = vmatpush1.msra.mxu0 0.0
        %1333 = vmatprep.subr.mxu0 0.0
        %1334 = vmatpush1.msra.mxu0 0.0
        %1335 = vmatprep.subr.mxu0 0.0
        %1336 = vmatpush1.msra.mxu0 0.0
        %1337 = vmatprep.subr.mxu0 0.0
        %1338 = vmatpush1.msra.mxu0 0.0
        %1339 = vmatprep.subr.mxu0 0.0
        %1340 = vmatpush1.msra.mxu0 0.0
        %1341 = vmatprep.subr.mxu0 0.0
        %1342 = vmatpush1.msra.mxu0 0.0
        %1343 = vmatprep.subr.mxu0 0.0
        %1344 = vmatpush1.msra.mxu0 0.0
        %1345 = vmatprep.subr.mxu0 0.0
        %1346 = vmatpush1.msra.mxu0 0.0
        %1347 = vmatprep.subr.mxu0 0.0
        %1348 = vmatpush1.msra.mxu0 0.0
        %1349 = vmatprep.subr.mxu0 0.0
        %1350 = vmatpush1.msra.mxu0 0.0
        %1351 = vmatprep.subr.mxu0 0.0
        %1352 = vmatpush1.msra.mxu0 0.0
        %1353 = vmatprep.subr.mxu0 0.0
        %1354 = vmatpush1.msra.mxu0 0.0
        %1355 = vmatprep.subr.mxu0 0.0
        %1356 = vmatpush1.msra.mxu0 0.0
        %1357 = vmatprep.subr.mxu0 0.0
        %1358 = vmatpush1.msra.mxu0 0.0
        %1359 = vmatprep.subr.mxu0 0.0
        %1360 = vmatpush1.msra.mxu0 0.0
        %1361 = vmatprep.subr.mxu0 0.0
        %1362 = vmatpush1.msra.mxu0 0.0
        %1363 = vmatprep.subr.mxu0 0.0
        %1364 = vmatpush1.msra.mxu0 0.0
        %1365 = vmatprep.subr.mxu0 0.0
        %1366 = vmatpush1.msra.mxu0 0.0
        %1367 = vmatprep.subr.mxu0 0.0
        %1368 = vmatpush1.msra.mxu0 0.0
        %1369 = vmatprep.mubr.f32.mxu0 0.0
        %1370 = vmatmul.mubr.f32.gmra.mrb[0].mxu0 %v1303
        %v1371 = vpop.f32.mrb[0].mxu0
        %v1372 = vadd.f32 0.0, %v1371
        %v1373 = vpop.f32.mrb[0].mxu0
        %1374 = vdwg.mxu0
        %v1375 = vadd.f32 %v1127, %v1372
        %1376 = vrot.lane.b32.xlu0 %v460, 104
        %v1377 = vpop.permute.xlu0 %1376
        %1378 = vrot.lane.b32.xlu0 %v547, 104
        %v1379 = vpop.permute.xlu0 %1378
        %1380 = vrot.lane.b32.xlu0 %v552, 104
        %v1381 = vpop.permute.xlu0 %1380
        %v1382 = vsel %vm645, %v1377, 0
        %v1384 = vsel %vm645, %v1379, 0
        %v1386 = vsel %vm645, %v1381, 0
        %1388 = vmatprep.subr.mxu0 0.0
        %1389 = vmatpush1.xpose.msra.mxu0 %v1384
        %1390 = vmatprep.subr.mxu0 0.0
        %1391 = vmatpush1.xpose.msra.mxu0 %v1386
        %1392 = vmatprep.subr.mxu0 0.0
        %1393 = vmatpush1.xpose.msra.mxu0 0.0
        %1394 = vmatprep.subr.mxu0 0.0
        %1395 = vmatpush1.xpose.msra.mxu0 0.0
        %1396 = vmatprep.subr.mxu0 0.0
        %1397 = vmatpush1.xpose.msra.mxu0 0.0
        %1398 = vmatprep.subr.mxu0 0.0
        %1399 = vmatpush1.xpose.msra.mxu0 0.0
        %1400 = vmatprep.subr.mxu0 0.0
        %1401 = vmatpush1.xpose.msra.mxu0 0.0
        %1402 = vmatprep.subr.mxu0 0.0
        %1403 = vmatpush1.xpose.msra.mxu0 0.0
        %1404 = vmatprep.subr.mxu0 0.0
        %1405 = vmatpush1.xpose.msra.mxu0 0.0
        %1406 = vmatprep.subr.mxu0 0.0
        %1407 = vmatpush1.xpose.msra.mxu0 0.0
        %1408 = vmatprep.subr.mxu0 0.0
        %1409 = vmatpush1.xpose.msra.mxu0 0.0
        %1410 = vmatprep.subr.mxu0 0.0
        %1411 = vmatpush1.xpose.msra.mxu0 0.0
        %1412 = vmatprep.subr.mxu0 0.0
        %1413 = vmatpush1.xpose.msra.mxu0 0.0
        %1414 = vmatprep.subr.mxu0 0.0
        %1415 = vmatpush1.xpose.msra.mxu0 0.0
        %1416 = vmatprep.subr.mxu0 0.0
        %1417 = vmatpush1.xpose.msra.mxu0 0.0
        %1418 = vmatprep.subr.mxu0 0.0
        %1419 = vmatpush1.xpose.msra.mxu0 0.0
        %1420 = vmatprep.subr.mxu0 0.0
        %1421 = vmatpush1.xpose.msra.mxu0 0.0
        %1422 = vmatprep.subr.mxu0 0.0
        %1423 = vmatpush1.xpose.msra.mxu0 0.0
        %1424 = vmatprep.subr.mxu0 0.0
        %1425 = vmatpush1.xpose.msra.mxu0 0.0
        %1426 = vmatprep.subr.mxu0 0.0
        %1427 = vmatpush1.xpose.msra.mxu0 0.0
        %1428 = vmatprep.subr.mxu0 0.0
        %1429 = vmatpush1.xpose.msra.mxu0 0.0
        %1430 = vmatprep.subr.mxu0 0.0
        %1431 = vmatpush1.xpose.msra.mxu0 0.0
        %1432 = vmatprep.subr.mxu0 0.0
        %1433 = vmatpush1.xpose.msra.mxu0 0.0
        %1434 = vmatprep.subr.mxu0 0.0
        %1435 = vmatpush1.xpose.msra.mxu0 0.0
        %1436 = vmatprep.subr.mxu0 0.0
        %1437 = vmatpush1.xpose.msra.mxu0 0.0
        %1438 = vmatprep.subr.mxu0 0.0
        %1439 = vmatpush1.xpose.msra.mxu0 0.0
        %1440 = vmatprep.subr.mxu0 0.0
        %1441 = vmatpush1.xpose.msra.mxu0 0.0
        %1442 = vmatprep.subr.mxu0 0.0
        %1443 = vmatpush1.xpose.msra.mxu0 0.0
        %1444 = vmatprep.subr.mxu0 0.0
        %1445 = vmatpush1.xpose.msra.mxu0 0.0
        %1446 = vmatprep.subr.mxu0 0.0
        %1447 = vmatpush1.xpose.msra.mxu0 0.0
        %1448 = vmatprep.subr.mxu0 0.0
        %1449 = vmatpush1.xpose.msra.mxu0 0.0
        %1450 = vmatprep.subr.mxu0 0.0
        %1451 = vmatpush1.xpose.msra.mxu0 0.0
        %1452 = vmatprep.mubr.f32.mxu0 0.0
        %1453 = vmatmul.mubr.f32.gmra.mrb[0].mxu0 %v1382
        %v1454 = vpop.f32.mrb[0].mxu0
        %v1455 = vadd.f32 0.0, %v1454
        %v1456 = vpop.f32.mrb[0].mxu0
        %1457 = vdwg.mxu0
        %v1458 = vsel %vm725, %v1455, -inf
        %1459 = vmax.xlane.f32.xlu0 %v1458
        %v1460 = vpop.xlane.xlu0 %1459
        %v1461 = vsub.f32 %v1455, %v1460
        %v1462 = vmul.f32 %v1461, 1.442695
        %v1463 = vpow.pop %v1462
        %v1464 = vsel %vm725, %v1463, 0.0
        %1465 = vadd.xlane.f32.xlu0 %v1464
        %v1466 = vpop.xlane.xlu0 %1465
        %v1467 = vrcp.pop %v1466
        %v1468 = vmul.f32 %v1463, %v1467
        %1469 = vrot.lane.b32.xlu0 %v633, 104
        %v1470 = vpop.permute.xlu0 %1469
        %1471 = vrot.lane.b32.xlu0 %v638, 104
        %v1472 = vpop.permute.xlu0 %1471
        %v1476 = vsel %vm725, %v1468, 0
        %1478 = vmatprep.subr.mxu0 0.0
        %1479 = vmatpush1.msra.mxu0 %v1470
        %1480 = vmatprep.subr.mxu0 0.0
        %1481 = vmatpush1.msra.mxu0 %v1472
        %1482 = vmatprep.subr.mxu0 0.0
        %1483 = vmatpush1.msra.mxu0 0.0
        %1484 = vmatprep.subr.mxu0 0.0
        %1485 = vmatpush1.msra.mxu0 0.0
        %1486 = vmatprep.subr.mxu0 0.0
        %1487 = vmatpush1.msra.mxu0 0.0
        %1488 = vmatprep.subr.mxu0 0.0
        %1489 = vmatpush1.msra.mxu0 0.0
        %1490 = vmatprep.subr.mxu0 0.0
        %1491 = vmatpush1.msra.mxu0 0.0
        %1492 = vmatprep.subr.mxu0 0.0
        %1493 = vmatpush1.msra.mxu0 0.0
        %1494 = vmatprep.subr.mxu0 0.0
        %1495 = vmatpush1.msra.mxu0 0.0
        %1496 = vmatprep.subr.mxu0 0.0
        %1497 = vmatpush1.msra.mxu0 0.0
        %1498 = vmatprep.subr.mxu0 0.0
        %1499 = vmatpush1.msra.mxu0 0.0
        %1500 = vmatprep.subr.mxu0 0.0
        %1501 = vmatpush1.msra.mxu0 0.0
        %1502 = vmatprep.subr.mxu0 0.0
        %1503 = vmatpush1.msra.mxu0 0.0
        %1504 = vmatprep.subr.mxu0 0.0
        %1505 = vmatpush1.msra.mxu0 0.0
        %1506 = vmatprep.subr.mxu0 0.0
        %1507 = vmatpush1.msra.mxu0 0.0
        %1508 = vmatprep.subr.mxu0 0.0
        %1509 = vmatpush1.msra.mxu0 0.0
        %1510 = vmatprep.subr.mxu0 0.0
        %1511 = vmatpush1.msra.mxu0 0.0
        %1512 = vmatprep.subr.mxu0 0.0
        %1513 = vmatpush1.msra.mxu0 0.0
        %1514 = vmatprep.subr.mxu0 0.0
        %1515 = vmatpush1.msra.mxu0 0.0
        %1516 = vmatprep.subr.mxu0 0.0
        %1517 = vmatpush1.msra.mxu0 0.0
        %1518 = vmatprep.subr.mxu0 0.0
        %1519 = vmatpush1.msra.mxu0 0.0
        %1520 = vmatprep.subr.mxu0 0.0
        %1521 = vmatpush1.msra.mxu0 0.0
        %1522 = vmatprep.subr.mxu0 0.0
        %1523 = vmatpush1.msra.mxu0 0.0
        %1524 = vmatprep.subr.mxu0 0.0
        %1525 = vmatpush1.msra.mxu0 0.0
        %1526 = vmatprep.subr.mxu0 0.0
        %1527 = vmatpush1.msra.mxu0 0.0
        %1528 = vmatprep.subr.mxu0 0.0
        %1529 = vmatpush1.msra.mxu0 0.0
        %1530 = vmatprep.subr.mxu0 0.0
        %1531 = vmatpush1.msra.mxu0 0.0
        %1532 = vmatprep.subr.mxu0 0.0
        %1533 = vmatpush1.msra.mxu0 0.0
        %1534 = vmatprep.subr.mxu0 0.0
        %1535 = vmatpush1.msra.mxu0 0.0
        %1536 = vmatprep.subr.mxu0 0.0
        %1537 = vmatpush1.msra.mxu0 0.0
        %1538 = vmatprep.subr.mxu0 0.0
        %1539 = vmatpush1.msra.mxu0 0.0
        %1540 = vmatprep.subr.mxu0 0.0
        %1541 = vmatpush1.msra.mxu0 0.0
        %1542 = vmatprep.mubr.f32.mxu0 0.0
        %1543 = vmatmul.mubr.f32.gmra.mrb[0].mxu0 %v1476
        %v1544 = vpop.f32.mrb[0].mxu0
        %v1545 = vadd.f32 0.0, %v1544
        %v1546 = vpop.f32.mrb[0].mxu0
        %1547 = vdwg.mxu0
        %v1549 = vsel %vm645, %v1545, 0
        %1551 = vmatprep.subr.mxu0 0.0
        %1552 = vmatpush1.msra.mxu0 %v644
        %1553 = vmatprep.subr.mxu0 0.0
        %1554 = vmatpush1.msra.mxu0 0.0
        %1555 = vmatprep.subr.mxu0 0.0
        %1556 = vmatpush1.msra.mxu0 0.0
        %1557 = vmatprep.subr.mxu0 0.0
        %1558 = vmatpush1.msra.mxu0 0.0
        %1559 = vmatprep.subr.mxu0 0.0
        %1560 = vmatpush1.msra.mxu0 0.0
        %1561 = vmatprep.subr.mxu0 0.0
        %1562 = vmatpush1.msra.mxu0 0.0
        %1563 = vmatprep.subr.mxu0 0.0
        %1564 = vmatpush1.msra.mxu0 0.0
        %1565 = vmatprep.subr.mxu0 0.0
        %1566 = vmatpush1.msra.mxu0 0.0
        %1567 = vmatprep.subr.mxu0 0.0
        %1568 = vmatpush1.msra.mxu0 0.0
        %1569 = vmatprep.subr.mxu0 0.0
        %1570 = vmatpush1.msra.mxu0 0.0
        %1571 = vmatprep.subr.mxu0 0.0
        %1572 = vmatpush1.msra.mxu0 0.0
        %1573 = vmatprep.subr.mxu0 0.0
        %1574 = vmatpush1.msra.mxu0 0.0
        %1575 = vmatprep.subr.mxu0 0.0
        %1576 = vmatpush1.msra.mxu0 0.0
        %1577 = vmatprep.subr.mxu0 0.0
        %1578 = vmatpush1.msra.mxu0 0.0
        %1579 = vmatprep.subr.mxu0 0.0
        %1580 = vmatpush1.msra.mxu0 0.0
        %1581 = vmatprep.subr.mxu0 0.0
        %1582 = vmatpush1.msra.mxu0 0.0
        %1583 = vmatprep.subr.mxu0 0.0
        %1584 = vmatpush1.msra.mxu0 0.0
        %1585 = vmatprep.subr.mxu0 0.0
        %1586 = vmatpush1.msra.mxu0 0.0
        %1587 = vmatprep.subr.mxu0 0.0
        %1588 = vmatpush1.msra.mxu0 0.0
        %1589 = vmatprep.subr.mxu0 0.0
        %1590 = vmatpush1.msra.mxu0 0.0
        %1591 = vmatprep.subr.mxu0 0.0
        %1592 = vmatpush1.msra.mxu0 0.0
        %1593 = vmatprep.subr.mxu0 0.0
        %1594 = vmatpush1.msra.mxu0 0.0
        %1595 = vmatprep.subr.mxu0 0.0
        %1596 = vmatpush1.msra.mxu0 0.0
        %1597 = vmatprep.subr.mxu0 0.0
        %1598 = vmatpush1.msra.mxu0 0.0
        %1599 = vmatprep.subr.mxu0 0.0
        %1600 = vmatpush1.msra.mxu0 0.0
        %1601 = vmatprep.subr.mxu0 0.0
        %1602 = vmatpush1.msra.mxu0 0.0
        %1603 = vmatprep.subr.mxu0 0.0
        %1604 = vmatpush1.msra.mxu0 0.0
        %1605 = vmatprep.subr.mxu0 0.0
        %1606 = vmatpush1.msra.mxu0 0.0
        %1607 = vmatprep.subr.mxu0 0.0
        %1608 = vmatpush1.msra.mxu0 0.0
        %1609 = vmatprep.subr.mxu0 0.0
        %1610 = vmatpush1.msra.mxu0 0.0
        %1611 = vmatprep.subr.mxu0 0.0
        %1612 = vmatpush1.msra.mxu0 0.0
        %1613 = vmatprep.subr.mxu0 0.0
        %1614 = vmatpush1.msra.mxu0 0.0
        %1615 = vmatprep.mubr.f32.mxu0 0.0
        %1616 = vmatmul.mubr.f32.gmra.mrb[0].mxu0 %v1549
        %v1617 = vpop.f32.mrb[0].mxu0
        %v1618 = vadd.f32 0.0, %v1617
        %v1619 = vpop.f32.mrb[0].mxu0
        %1620 = vdwg.mxu0
        %v1621 = vadd.f32 %v1375, %v1618
        %v1622 = vld [vmem:[%s9] sm:$0x1]
        %v1624 = vlaneseq
        %v1625 = vshrl.u32 %v1624, 7
        %v1626 = vsub.s32 0, %v1625
        %v1627 = vrot.slane %v1622, %v1626
        %v1629 = vadd.f32 %v1621, %v1627
        %1630 = vst.msk [vmem:[%s365] sm:$0xff] %vm389, %v1629
        %s1631 = sand.u32 %s252, 1
        %s1632 = scalar_lea.sflag [#allocation3], %s1631
        %s1633 = sand.u32 %s252, 1
        %s1634 = smul.addr %s1633, 8
        %s1635 = scalar_lea.vmem [#allocation2], %s1634
        // Predicated region
        $region61: #{cross_attention.1} parent=59 // pred_check
          %p1636 = pneg %p262
        $region62: #{cross_attention.1} parent=59 // pred_check_branch
          %1638 = sbr.rel (%p1636) target = $region64
        $region63: #{cross_attention.1} parent=59 // pred_region
          %s1640 = ssub.s32 128, 128
          %1641 = vsyncadd %s1632, %s1640
          %s1642 = smul.addr %s24, 128
          %s1643 = scalar_lea.hbm %s10, %s1642
          %s1645 = sshll.u32 %s1635, 4
          %s1646 = int_to_ptr.vmem [resolvable:$true] %s1645
          %1648 = dma.vmem_to_hbm [thread:$0]  %s1646, 128, %s1643, %s1632
        $region64: #{cross_attention.1} parent=59 // pred_fallthru
          _
      $region60: #{cross_attention.1} parent=5 // pred_fallthru
        _
      %p1649 = scmp.le.s32.totalorder 2, %s19
      // Predicated region
      $region65: #{cross_attention.1} parent=5 // pred_check
        %p1650 = pneg %p1649
      $region66: #{cross_attention.1} parent=5 // pred_check_branch
        %1652 = sbr.rel (%p1650) target = $region68
      $region67: #{cross_attention.1} parent=5 // pred_region
        %s1653 = ssub.s32 %s19, 2
        // Predicated region
        $region69: #{cross_attention.1} parent=67 // pred_check
          %p1654 = pneg %p268
        $region70: #{cross_attention.1} parent=67 // pred_check_branch
          %1656 = sbr.rel (%p1654) target = $region72
        $region71: #{cross_attention.1} parent=67 // pred_region
          %s1657 = sand.u32 %s253, 1
          %s1658 = scalar_lea.sflag [#allocation3], %s1657
          %s1659 = sand.u32 %s253, 1
          %s1660 = smul.addr %s1659, 8
          %s1661 = scalar_lea.vmem [#allocation2], %s1660
          %1662 = dma.done %s1658, 128
        $region72: #{cross_attention.1} parent=67 // pred_fallthru
          _
      $region68: #{cross_attention.1} parent=5 // pred_fallthru
        _
    $region6: #{cross_attention.1} parent=1 // loop_footer
      %s23 = sadd.s32 1, %s19
    $region7: #{cross_attention.1} parent=1 // loop_footer_branch
      %18 = sbr.rel target = $region3
    $region8: #{cross_attention.1} parent=1 // loop_exit
      _
    %1663 = vsyncpa [#allocation3], 1
    %s1664 = scalar_lea.sflag [#allocation3], 1
    %1665 = vsyncpa %s1664, 1

</llo_original>
